<compile_context>
chip_gen: v7x
topology: tpu7x:2x2x1
jax: 0.10.0
libtpu: 0.0.40
codegen_flags: <defaults>
</compile_context>

<pallas_src>
import functools

import jax
import jax.numpy as jnp
from jax import lax
from jax.experimental import pallas as pl
from jax.experimental.pallas import tpu as pltpu

EPS = 1e-5


def _vmem_capacity_bytes():
    try:
        return int(pltpu.get_tpu_info().vmem_capacity_bytes)
    except Exception:
        return 64 * 1024 * 1024  # conservative default (v7x-sized)


_VMEM_BYTES = _vmem_capacity_bytes()
# 1024-row tail tiles on 128 MiB-VMEM parts (v5e/v6e), 512 on 64 MiB parts (v7x).
_TAIL_TILE_CAP = 1024 if _VMEM_BYTES >= (96 << 20) else 512
_VMEM_LIMIT_BYTES = int(min(96 << 20, (_VMEM_BYTES * 3) // 4))


# ----------------------------------------------------------------------------
# Kernel A: conv1 (1x1) + BN1 + ReLU -> conv2 (3x3, pad=1, stride) + BN2 + ReLU
# One grid step per batch image; padded conv2 input staged in a VMEM scratch.
# ----------------------------------------------------------------------------
def _stage12_kernel(x_ref, w1_ref, b1_ref, w2_ref, b2_ref, o_ref,
                    xp_ref, patch_ref, *, h, w, ho, wo, stride):
    planes = w1_ref.shape[1]

    # conv1 (1x1) == matmul over channels; BN1 scale folded into w1.
    h1 = jnp.dot(x_ref[0], w1_ref[...], preferred_element_type=jnp.float32)
    h1 = jnp.maximum(h1 + b1_ref[...], 0.0)                    # (h*w, planes) f32

    # Stage into the zero-padded conv2 input.  Only the 1-pixel halo is zeroed
    # (cheap perimeter stores); the interior is fully overwritten below.
    zrow = jnp.zeros((1, w + 2, planes), jnp.float32)
    zcol = jnp.zeros((h, 1, planes), jnp.float32)
    xp_ref[0:1, :, :] = zrow
    xp_ref[h + 1:h + 2, :, :] = zrow
    xp_ref[1:h + 1, 0:1, :] = zcol
    xp_ref[1:h + 1, w + 1:w + 2, :] = zcol
    xp_ref[1:h + 1, 1:w + 1, :] = h1.reshape(h, w, planes)

    # conv2 (3x3): kw taps folded into the contraction -> 3 matmuls, K=3*planes.
    # The folded patch is built in a bf16 scratch via static lane-offset stores.
    acc = None
    for kh in range(3):
        for kw in range(3):
            if stride == 1:
                tap = xp_ref[kh:kh + ho, kw:kw + wo, :]
            else:
                # TODO(synk): deinterleave W in the scratch layout so stride-2
                # blocks avoid the sublane-strided read.
                tap = xp_ref[pl.ds(kh, ho, stride), pl.ds(kw, wo, stride), :]
            patch_ref[:, kw * planes:(kw + 1) * planes] = (
                tap.reshape(ho * wo, planes).astype(jnp.bfloat16))
        part = jnp.dot(patch_ref[...], w2_ref[kh],
                       preferred_element_type=jnp.float32)
        acc = part if acc is None else acc + part
    # NOTE: for planes < 128 the output store is lane-sparse (masked vst); at
    # real ResNet widths (planes >= 64..128) this is acceptable.
    o_ref[...] = jnp.maximum(acc + b2_ref[...], 0.0).astype(o_ref.dtype)


# ----------------------------------------------------------------------------
# Kernel B: conv3 (1x1) + BN3 + shortcut + residual add + ReLU (fully fused)
# ----------------------------------------------------------------------------
def _tail_proj_kernel(h2_ref, xs_ref, w3_ref, ws_ref, b3_ref, bs_ref, o_ref):
    y = jnp.dot(h2_ref[...], w3_ref[...],
                preferred_element_type=jnp.float32) + b3_ref[...]
    sc = jnp.dot(xs_ref[...], ws_ref[...],
                 preferred_element_type=jnp.float32) + bs_ref[...]
    o_ref[...] = jnp.maximum(y + sc, 0.0).astype(o_ref.dtype)


def _tail_identity_kernel(h2_ref, sc_ref, w3_ref, b3_ref, o_ref):
    y = jnp.dot(h2_ref[...], w3_ref[...],
                preferred_element_type=jnp.float32) + b3_ref[...]
    o_ref[...] = jnp.maximum(y + sc_ref[...].astype(jnp.float32), 0.0
                             ).astype(o_ref.dtype)


# ----------------------------------------------------------------------------
# Pallas wrappers
# ----------------------------------------------------------------------------
def _full_spec(shape):
    nd = len(shape)
    return pl.BlockSpec(shape, lambda *_args, _nd=nd: (0,) * _nd)


def conv1_conv2(x_flat, w1, b1, w2f, b2, h, w, stride):
    n, hw, cin = x_flat.shape
    planes = w1.shape[1]
    ho = (h + 2 - 3) // stride + 1
    wo = (w + 2 - 3) // stride + 1
    m = n * ho * wo
    kernel = functools.partial(_stage12_kernel, h=h, w=w, ho=ho, wo=wo,
                               stride=stride)
    flops = n * (2 * h * w * cin * planes + 2 * 9 * ho * wo * planes * planes)
    bytes_accessed = (x_flat.size * 2 + m * planes * 2
                      + w1.size * 2 + w2f.size * 2 + (b1.size + b2.size) * 4)
    return pl.pallas_call(
        kernel,
        out_shape=jax.ShapeDtypeStruct((m, planes), jnp.bfloat16),
        grid=(n,),
        in_specs=[
            pl.BlockSpec((1, hw, cin), lambda i: (i, 0, 0)),
            _full_spec(w1.shape),
            _full_spec(b1.shape),
            _full_spec(w2f.shape),
            _full_spec(b2.shape),
        ],
        out_specs=pl.BlockSpec((ho * wo, planes), lambda i: (i, 0)),
        scratch_shapes=[
            pltpu.VMEM((h + 2, w + 2, planes), jnp.float32),     # padded conv2 in
            pltpu.VMEM((ho * wo, 3 * planes), jnp.bfloat16),     # kw-folded patch
        ],
        compiler_params=pltpu.CompilerParams(
            dimension_semantics=("parallel",),
            vmem_limit_bytes=_VMEM_LIMIT_BYTES),
        cost_estimate=pl.CostEstimate(
            flops=flops, transcendentals=0, bytes_accessed=bytes_accessed),
    )(x_flat, w1, b1, w2f, b2)


def conv3_shortcut_add_relu(h2_2d, shortcut_2d, w3, b3, ws=None, bs=None):
    m, planes = h2_2d.shape
    cout = w3.shape[1]
    tile_m = m if m <= _TAIL_TILE_CAP else _TAIL_TILE_CAP
    grid = (pl.cdiv(m, tile_m),)     # partial last block handled by Pallas

    def row_spec(c):
        return pl.BlockSpec((tile_m, c), lambda i: (i, 0))

    out_spec = pl.BlockSpec((tile_m, cout), lambda i: (i, 0))
    cparams = pltpu.CompilerParams(dimension_semantics=("parallel",),
                                   vmem_limit_bytes=_VMEM_LIMIT_BYTES)

    if ws is not None:
        cin = shortcut_2d.shape[1]
        flops = 2 * m * cout * (planes + cin)
        bytes_accessed = ((h2_2d.size + shortcut_2d.size) * 2
                          + (w3.size + ws.size) * 2
                          + (b3.size + bs.size) * 4 + m * cout * 2)
        return pl.pallas_call(
            _tail_proj_kernel,
            out_shape=jax.ShapeDtypeStruct((m, cout), jnp.bfloat16),
            grid=grid,
            in_specs=[row_spec(planes), row_spec(cin),
                      _full_spec(w3.shape), _full_spec(ws.shape),
                      _full_spec(b3.shape), _full_spec(bs.shape)],
            out_specs=out_spec,
            compiler_params=cparams,
            cost_estimate=pl.CostEstimate(
                flops=flops, transcendentals=0, bytes_accessed=bytes_accessed),
        )(h2_2d, shortcut_2d, w3, ws, b3, bs)

    flops = 2 * m * cout * planes
    bytes_accessed = ((h2_2d.size + shortcut_2d.size) * 2
                      + w3.size * 2 + b3.size * 4 + m * cout * 2)
    return pl.pallas_call(
        _tail_identity_kernel,
        out_shape=jax.ShapeDtypeStruct((m, cout), jnp.bfloat16),
        grid=grid,
        in_specs=[row_spec(planes), row_spec(cout),
                  _full_spec(w3.shape), _full_spec(b3.shape)],
        out_specs=out_spec,
        compiler_params=cparams,
        cost_estimate=pl.CostEstimate(
            flops=flops, transcendentals=0, bytes_accessed=bytes_accessed),
    )(h2_2d, shortcut_2d, w3, b3)


# ----------------------------------------------------------------------------
# Bottleneck forward
# ----------------------------------------------------------------------------
def bottleneck_forward(x_nchw, params, stride):
    x = jnp.transpose(x_nchw, (0, 2, 3, 1)).astype(jnp.bfloat16)   # NCHW -> NHWC
    n, h, w, cin = x.shape
    cout = params["w3"].shape[1]
    ho = (h + 2 - 3) // stride + 1
    wo = (w + 2 - 3) // stride + 1
    m = n * ho * wo

    x_flat = x.reshape(n, h * w, cin)          # free reshape in HBM (contiguous)

    h2 = conv1_conv2(x_flat, params["w1"], params["b1"],
                     params["w2"], params["b2"], h, w, stride)     # (M, planes)

    if params.get("ws") is not None:
        # TODO(synk): for stride>1 the shortcut subsample is still an XLA strided
        # slice; it could be emitted directly by Kernel A while x is in VMEM.
        xs = x if stride == 1 else x[:, ::stride, ::stride, :]
        y2d = conv3_shortcut_add_relu(h2, xs.reshape(m, cin),
                                      params["w3"], params["b3"],
                                      params["ws"], params["bs"])
    else:
        assert stride == 1, "identity shortcut requires stride == 1"
        y2d = conv3_shortcut_add_relu(h2, x_flat.reshape(m, cin),
                                      params["w3"], params["b3"])

    y = y2d.reshape(n, ho, wo, cout)
    return jnp.transpose(y, (0, 3, 1, 2))                          # NHWC -> NCHW


# ----------------------------------------------------------------------------
# Parameter folding / reference / main
# ----------------------------------------------------------------------------
def _bn_params(c, base):
    gamma = 1.0 + 0.01 * (base + jnp.arange(c, dtype=jnp.float32))
    beta = 0.05 * (jnp.arange(c, dtype=jnp.float32) - base)
    mean = 0.02 * jnp.arange(c, dtype=jnp.float32)
    var = 1.0 + 0.03 * jnp.arange(c, dtype=jnp.float32)
    scale = gamma / jnp.sqrt(var + EPS)
    bias = beta - mean * scale
    return (gamma, beta, mean, var), scale, bias


def fold_pointwise(w_oihw, scale):
    # OIHW 1x1 conv weight -> (Cin, Cout) with BN scale folded in, bf16.
    return (w_oihw[:, :, 0, 0].T * scale[None, :]).astype(jnp.bfloat16)


def fold_3x3(w_oihw, scale):
    # OIHW 3x3 conv weight -> (3, 3*Cin, Cout) with BN scale folded in, bf16.
    # The K axis is ordered [kw, cin], matching the in-kernel patch layout.
    w_hwio = jnp.transpose(w_oihw, (2, 3, 1, 0)) * scale[None, None, None, :]
    kh, kw, ci, co = w_hwio.shape
    return w_hwio.reshape(kh, kw * ci, co).astype(jnp.bfloat16)


def _ref_forward(x, w1, w2, w3, ws, bns, stride):
    # Pure-JAX reference mirroring the PyTorch module in eval mode, with the same
    # bf16 quantization of inputs/weights/intermediate activations as the kernels
    # (accumulation stays f32 in both).
    bf = lambda a: a.astype(jnp.bfloat16).astype(jnp.float32)

    def conv(x_, w_, s=1, p=0):
        return lax.conv_general_dilated(
            x_, w_, (s, s), [(p, p), (p, p)],
            dimension_numbers=("NCHW", "OIHW", "NCHW"),
            precision=lax.Precision.HIGHEST)

    def bn(x_, prm):
        g, b, m, v = prm
        g = g[None, :, None, None]; b = b[None, :, None, None]
        m = m[None, :, None, None]; v = v[None, :, None, None]
        return g * (x_ - m) / jnp.sqrt(v + EPS) + b

    xq = bf(x)
    out = bf(jax.nn.relu(bn(conv(xq, bf(w1)), bns[0])))
    out = bf(jax.nn.relu(bn(conv(out, bf(w2), s=stride, p=1), bns[1])))
    out = bn(conv(out, bf(w3)), bns[2])
    if ws is None:
        sc = xq
    else:
        sc = bn(conv(xq, bf(ws), s=stride), bns[3])
    return jax.nn.relu(out + sc)


if __name__ == "__main__":
    def run_case(key, n, in_planes, planes, hw, stride):
        expansion = 4
        out_planes = expansion * planes
        k1, k2, k3, k4, kx = jax.random.split(key, 5)

        # PyTorch-style OIHW conv weights, bias=False everywhere.
        w1 = 0.1 * jax.random.normal(k1, (planes, in_planes, 1, 1), jnp.float32)
        w2 = 0.1 * jax.random.normal(k2, (planes, planes, 3, 3), jnp.float32)
        w3 = 0.1 * jax.random.normal(k3, (out_planes, planes, 1, 1), jnp.float32)
        x = jax.random.normal(kx, (n, in_planes, hw, hw), jnp.float32)

        bn1, s1, b1 = _bn_params(planes, 0.0)
        bn2, s2, b2 = _bn_params(planes, 1.0)
        bn3, s3, b3 = _bn_params(out_planes, 2.0)

        params = {
            "w1": fold_pointwise(w1, s1), "b1": b1.reshape(1, -1),
            "w2": fold_3x3(w2, s2),       "b2": b2.reshape(1, -1),
            "w3": fold_pointwise(w3, s3), "b3": b3.reshape(1, -1),
            "ws": None, "bs": None,
        }
        ws = None
        bn_s = None
        if stride != 1 or in_planes != out_planes:
            ws = 0.1 * jax.random.normal(k4, (out_planes, in_planes, 1, 1),
                                         jnp.float32)
            bn_s, s_s, b_s = _bn_params(out_planes, 3.0)
            params["ws"] = fold_pointwise(ws, s_s)
            params["bs"] = b_s.reshape(1, -1)

        y = jax.block_until_ready(bottleneck_forward(x, params, stride))
        y_ref = _ref_forward(x, w1, w2, w3, ws, (bn1, bn2, bn3, bn_s), stride)

        ho = (hw + 2 - 3) // stride + 1
        assert y.shape == (n, out_planes, ho, ho), y.shape
        # Output is bf16 (halved HBM writeback on the memory-bound tail), so the
        # tolerance accounts for one extra bf16 rounding of O(1) values.
        err = float(jnp.max(jnp.abs(y - y_ref)))
        assert err < 5e-2, f"max abs error {err}"

    key = jax.random.PRNGKey(0)
    k_a, k_b = jax.random.split(key)
    # Projection-shortcut case (in_planes != expansion*planes).
    run_case(k_a, n=2, in_planes=4, planes=4, hw=16, stride=1)
    # Identity-shortcut case (in_planes == expansion*planes, stride=1).
    run_case(k_b, n=2, in_planes=16, planes=4, hw=16, stride=1)
    print("KERNEL_OK")
</pallas_src>

<mosaic_0001>
module attributes {stable_mosaic.version = 11 : i64} {
  func.func @_stage12_kernel(%arg0: i32, %arg1: memref<1x256x4xbf16, #tpu.memory_space<vmem>>, %arg2: memref<4x4xbf16, #tpu.memory_space<vmem>>, %arg3: memref<1x4xf32, #tpu.memory_space<vmem>>, %arg4: memref<3x12x4xbf16, #tpu.memory_space<vmem>>, %arg5: memref<1x4xf32, #tpu.memory_space<vmem>>, %arg6: memref<256x4xbf16, #tpu.memory_space<vmem>>, %arg7: memref<18x18x4xf32, #tpu.memory_space<vmem>>, %arg8: memref<256x12xbf16, #tpu.memory_space<vmem>>) attributes {dimension_semantics = [#tpu.dimension_semantics<parallel>], iteration_bounds = array<i64: 2>, scalar_prefetch = 0 : i64, scratch_operands = 2 : i64, tpu.core_type = #tpu.core_type<tc>, window_params = [{transform_indices = @transform_0, window_bounds = array<i64: 1, 256, 4>}, {pipeline_mode = #tpu.pipeline_mode<synchronous>, transform_indices = @transform_1, window_bounds = array<i64: 4, 4>}, {pipeline_mode = #tpu.pipeline_mode<synchronous>, transform_indices = @transform_2, window_bounds = array<i64: 1, 4>}, {pipeline_mode = #tpu.pipeline_mode<synchronous>, transform_indices = @transform_3, window_bounds = array<i64: 3, 12, 4>}, {pipeline_mode = #tpu.pipeline_mode<synchronous>, transform_indices = @transform_4, window_bounds = array<i64: 1, 4>}, {transform_indices = @transform_5, window_bounds = array<i64: 256, 4>}]} {
    %c0 = arith.constant 0 : index
    %c0_0 = arith.constant 0 : index
    %c0_1 = arith.constant 0 : index
    %0 = vector.load %arg1[%c0, %c0_0, %c0_1] : memref<1x256x4xbf16, #tpu.memory_space<vmem>>, vector<1x256x4xbf16>
    %1 = vector.shape_cast %0 : vector<1x256x4xbf16> to vector<256x4xbf16>
    %c0_2 = arith.constant 0 : index
    %c0_3 = arith.constant 0 : index
    %2 = vector.load %arg2[%c0_2, %c0_3] : memref<4x4xbf16, #tpu.memory_space<vmem>>, vector<4x4xbf16>
    %cst = arith.constant dense<0.000000e+00> : vector<256x4xf32>
    %3 = tpu.matmul %1, %2, %cst {dimension_numbers = #tpu.dot_dimension_numbers<[1], [0], [0], [1], [0, 0, 1, 1], [], []>} : vector<256x4xbf16>, vector<4x4xbf16>, vector<256x4xf32> -> vector<256x4xf32>
    %c0_4 = arith.constant 0 : index
    %c0_5 = arith.constant 0 : index
    %4 = vector.load %arg3[%c0_4, %c0_5] : memref<1x4xf32, #tpu.memory_space<vmem>>, vector<1x4xf32>
    %5 = vector.broadcast %4 : vector<1x4xf32> to vector<256x4xf32>
    %6 = arith.addf %3, %5 : vector<256x4xf32>
    %cst_6 = arith.constant 0.000000e+00 : f32
    %7 = vector.broadcast %cst_6 : f32 to vector<256x4xf32>
    %8 = arith.maximumf %6, %7 : vector<256x4xf32>
    %cst_7 = arith.constant 0.000000e+00 : f32
    %9 = vector.broadcast %cst_7 : f32 to vector<1x18x4xf32>
    %cst_8 = arith.constant 0.000000e+00 : f32
    %10 = vector.broadcast %cst_8 : f32 to vector<16x1x4xf32>
    %c0_9 = arith.constant 0 : index
    %c0_10 = arith.constant 0 : index
    %c0_11 = arith.constant 0 : index
    %11 = vector.load %arg7[%c0_9, %c0_10, %c0_11] : memref<18x18x4xf32, #tpu.memory_space<vmem>>, vector<1x18x4xf32>
    tpu.vector_store %arg7[%c0_9, %c0_10, %c0_11], %9 {strides = array<i32>} : memref<18x18x4xf32, #tpu.memory_space<vmem>>, vector<1x18x4xf32>,
    %c17 = arith.constant 17 : index
    %c0_12 = arith.constant 0 : index
    %c0_13 = arith.constant 0 : index
    %12 = vector.load %arg7[%c17, %c0_12, %c0_13] : memref<18x18x4xf32, #tpu.memory_space<vmem>>, vector<1x18x4xf32>
    tpu.vector_store %arg7[%c17, %c0_12, %c0_13], %9 {strides = array<i32>} : memref<18x18x4xf32, #tpu.memory_space<vmem>>, vector<1x18x4xf32>,
    %c1 = arith.constant 1 : index
    %c0_14 = arith.constant 0 : index
    %c0_15 = arith.constant 0 : index
    %13 = vector.load %arg7[%c1, %c0_14, %c0_15] : memref<18x18x4xf32, #tpu.memory_space<vmem>>, vector<16x1x4xf32>
    tpu.vector_store %arg7[%c1, %c0_14, %c0_15], %10 {strides = array<i32>} : memref<18x18x4xf32, #tpu.memory_space<vmem>>, vector<16x1x4xf32>,
    %c1_16 = arith.constant 1 : index
    %c17_17 = arith.constant 17 : index
    %c0_18 = arith.constant 0 : index
    %14 = vector.load %arg7[%c1_16, %c17_17, %c0_18] : memref<18x18x4xf32, #tpu.memory_space<vmem>>, vector<16x1x4xf32>
    tpu.vector_store %arg7[%c1_16, %c17_17, %c0_18], %10 {strides = array<i32>} : memref<18x18x4xf32, #tpu.memory_space<vmem>>, vector<16x1x4xf32>,
    %15 = vector.shape_cast %8 : vector<256x4xf32> to vector<16x16x4xf32>
    %c1_19 = arith.constant 1 : index
    %c1_20 = arith.constant 1 : index
    %c0_21 = arith.constant 0 : index
    %16 = vector.load %arg7[%c1_19, %c1_20, %c0_21] : memref<18x18x4xf32, #tpu.memory_space<vmem>>, vector<16x16x4xf32>
    tpu.vector_store %arg7[%c1_19, %c1_20, %c0_21], %15 {strides = array<i32>} : memref<18x18x4xf32, #tpu.memory_space<vmem>>, vector<16x16x4xf32>,
    %c0_22 = arith.constant 0 : index
    %c0_23 = arith.constant 0 : index
    %c0_24 = arith.constant 0 : index
    %17 = vector.load %arg7[%c0_22, %c0_23, %c0_24] : memref<18x18x4xf32, #tpu.memory_space<vmem>>, vector<16x16x4xf32>
    %18 = vector.shape_cast %17 : vector<16x16x4xf32> to vector<256x4xf32>
    %19 = arith.truncf %18 : vector<256x4xf32> to vector<256x4xbf16>
    %c0_25 = arith.constant 0 : index
    %c0_26 = arith.constant 0 : index
    %20 = vector.load %arg8[%c0_25, %c0_26] : memref<256x12xbf16, #tpu.memory_space<vmem>>, vector<256x4xbf16>
    tpu.vector_store %arg8[%c0_25, %c0_26], %19 {strides = array<i32>} : memref<256x12xbf16, #tpu.memory_space<vmem>>, vector<256x4xbf16>,
    %c0_27 = arith.constant 0 : index
    %c1_28 = arith.constant 1 : index
    %c0_29 = arith.constant 0 : index
    %21 = vector.load %arg7[%c0_27, %c1_28, %c0_29] : memref<18x18x4xf32, #tpu.memory_space<vmem>>, vector<16x16x4xf32>
    %22 = vector.shape_cast %21 : vector<16x16x4xf32> to vector<256x4xf32>
    %23 = arith.truncf %22 : vector<256x4xf32> to vector<256x4xbf16>
    %c0_30 = arith.constant 0 : index
    %c4 = arith.constant 4 : index
    %24 = vector.load %arg8[%c0_30, %c4] : memref<256x12xbf16, #tpu.memory_space<vmem>>, vector<256x4xbf16>
    tpu.vector_store %arg8[%c0_30, %c4], %23 {strides = array<i32>} : memref<256x12xbf16, #tpu.memory_space<vmem>>, vector<256x4xbf16>,
    %c0_31 = arith.constant 0 : index
    %c2 = arith.constant 2 : index
    %c0_32 = arith.constant 0 : index
    %25 = vector.load %arg7[%c0_31, %c2, %c0_32] : memref<18x18x4xf32, #tpu.memory_space<vmem>>, vector<16x16x4xf32>
    %26 = vector.shape_cast %25 : vector<16x16x4xf32> to vector<256x4xf32>
    %27 = arith.truncf %26 : vector<256x4xf32> to vector<256x4xbf16>
    %c0_33 = arith.constant 0 : index
    %c8 = arith.constant 8 : index
    %28 = vector.load %arg8[%c0_33, %c8] : memref<256x12xbf16, #tpu.memory_space<vmem>>, vector<256x4xbf16>
    tpu.vector_store %arg8[%c0_33, %c8], %27 {strides = array<i32>} : memref<256x12xbf16, #tpu.memory_space<vmem>>, vector<256x4xbf16>,
    %c0_34 = arith.constant 0 : index
    %c0_35 = arith.constant 0 : index
    %29 = vector.load %arg8[%c0_34, %c0_35] : memref<256x12xbf16, #tpu.memory_space<vmem>>, vector<256x12xbf16>
    %c0_36 = arith.constant 0 : index
    %c0_37 = arith.constant 0 : index
    %c0_38 = arith.constant 0 : index
    %30 = vector.load %arg4[%c0_36, %c0_37, %c0_38] : memref<3x12x4xbf16, #tpu.memory_space<vmem>>, vector<1x12x4xbf16>
    %31 = vector.shape_cast %30 : vector<1x12x4xbf16> to vector<12x4xbf16>
    %cst_39 = arith.constant dense<0.000000e+00> : vector<256x4xf32>
    %32 = tpu.matmul %29, %31, %cst_39 {dimension_numbers = #tpu.dot_dimension_numbers<[1], [0], [0], [1], [0, 0, 1, 1], [], []>} : vector<256x12xbf16>, vector<12x4xbf16>, vector<256x4xf32> -> vector<256x4xf32>
    %c1_40 = arith.constant 1 : index
    %c0_41 = arith.constant 0 : index
    %c0_42 = arith.constant 0 : index
    %33 = vector.load %arg7[%c1_40, %c0_41, %c0_42] : memref<18x18x4xf32, #tpu.memory_space<vmem>>, vector<16x16x4xf32>
    %34 = vector.shape_cast %33 : vector<16x16x4xf32> to vector<256x4xf32>
    %35 = arith.truncf %34 : vector<256x4xf32> to vector<256x4xbf16>
    %c0_43 = arith.constant 0 : index
    %c0_44 = arith.constant 0 : index
    %36 = vector.load %arg8[%c0_43, %c0_44] : memref<256x12xbf16, #tpu.memory_space<vmem>>, vector<256x4xbf16>
    tpu.vector_store %arg8[%c0_43, %c0_44], %35 {strides = array<i32>} : memref<256x12xbf16, #tpu.memory_space<vmem>>, vector<256x4xbf16>,
    %c1_45 = arith.constant 1 : index
    %c1_46 = arith.constant 1 : index
    %c0_47 = arith.constant 0 : index
    %37 = vector.load %arg7[%c1_45, %c1_46, %c0_47] : memref<18x18x4xf32, #tpu.memory_space<vmem>>, vector<16x16x4xf32>
    %38 = vector.shape_cast %37 : vector<16x16x4xf32> to vector<256x4xf32>
    %39 = arith.truncf %38 : vector<256x4xf32> to vector<256x4xbf16>
    %c0_48 = arith.constant 0 : index
    %c4_49 = arith.constant 4 : index
    %40 = vector.load %arg8[%c0_48, %c4_49] : memref<256x12xbf16, #tpu.memory_space<vmem>>, vector<256x4xbf16>
    tpu.vector_store %arg8[%c0_48, %c4_49], %39 {strides = array<i32>} : memref<256x12xbf16, #tpu.memory_space<vmem>>, vector<256x4xbf16>,
    %c1_50 = arith.constant 1 : index
    %c2_51 = arith.constant 2 : index
    %c0_52 = arith.constant 0 : index
    %41 = vector.load %arg7[%c1_50, %c2_51, %c0_52] : memref<18x18x4xf32, #tpu.memory_space<vmem>>, vector<16x16x4xf32>
    %42 = vector.shape_cast %41 : vector<16x16x4xf32> to vector<256x4xf32>
    %43 = arith.truncf %42 : vector<256x4xf32> to vector<256x4xbf16>
    %c0_53 = arith.constant 0 : index
    %c8_54 = arith.constant 8 : index
    %44 = vector.load %arg8[%c0_53, %c8_54] : memref<256x12xbf16, #tpu.memory_space<vmem>>, vector<256x4xbf16>
    tpu.vector_store %arg8[%c0_53, %c8_54], %43 {strides = array<i32>} : memref<256x12xbf16, #tpu.memory_space<vmem>>, vector<256x4xbf16>,
    %c0_55 = arith.constant 0 : index
    %c0_56 = arith.constant 0 : index
    %45 = vector.load %arg8[%c0_55, %c0_56] : memref<256x12xbf16, #tpu.memory_space<vmem>>, vector<256x12xbf16>
    %c1_57 = arith.constant 1 : index
    %c0_58 = arith.constant 0 : index
    %c0_59 = arith.constant 0 : index
    %46 = vector.load %arg4[%c1_57, %c0_58, %c0_59] : memref<3x12x4xbf16, #tpu.memory_space<vmem>>, vector<1x12x4xbf16>
    %47 = vector.shape_cast %46 : vector<1x12x4xbf16> to vector<12x4xbf16>
    %cst_60 = arith.constant dense<0.000000e+00> : vector<256x4xf32>
    %48 = tpu.matmul %45, %47, %cst_60 {dimension_numbers = #tpu.dot_dimension_numbers<[1], [0], [0], [1], [0, 0, 1, 1], [], []>} : vector<256x12xbf16>, vector<12x4xbf16>, vector<256x4xf32> -> vector<256x4xf32>
    %49 = arith.addf %32, %48 : vector<256x4xf32>
    %c2_61 = arith.constant 2 : index
    %c0_62 = arith.constant 0 : index
    %c0_63 = arith.constant 0 : index
    %50 = vector.load %arg7[%c2_61, %c0_62, %c0_63] : memref<18x18x4xf32, #tpu.memory_space<vmem>>, vector<16x16x4xf32>
    %51 = vector.shape_cast %50 : vector<16x16x4xf32> to vector<256x4xf32>
    %52 = arith.truncf %51 : vector<256x4xf32> to vector<256x4xbf16>
    %c0_64 = arith.constant 0 : index
    %c0_65 = arith.constant 0 : index
    %53 = vector.load %arg8[%c0_64, %c0_65] : memref<256x12xbf16, #tpu.memory_space<vmem>>, vector<256x4xbf16>
    tpu.vector_store %arg8[%c0_64, %c0_65], %52 {strides = array<i32>} : memref<256x12xbf16, #tpu.memory_space<vmem>>, vector<256x4xbf16>,
    %c2_66 = arith.constant 2 : index
    %c1_67 = arith.constant 1 : index
    %c0_68 = arith.constant 0 : index
    %54 = vector.load %arg7[%c2_66, %c1_67, %c0_68] : memref<18x18x4xf32, #tpu.memory_space<vmem>>, vector<16x16x4xf32>
    %55 = vector.shape_cast %54 : vector<16x16x4xf32> to vector<256x4xf32>
    %56 = arith.truncf %55 : vector<256x4xf32> to vector<256x4xbf16>
    %c0_69 = arith.constant 0 : index
    %c4_70 = arith.constant 4 : index
    %57 = vector.load %arg8[%c0_69, %c4_70] : memref<256x12xbf16, #tpu.memory_space<vmem>>, vector<256x4xbf16>
    tpu.vector_store %arg8[%c0_69, %c4_70], %56 {strides = array<i32>} : memref<256x12xbf16, #tpu.memory_space<vmem>>, vector<256x4xbf16>,
    %c2_71 = arith.constant 2 : index
    %c2_72 = arith.constant 2 : index
    %c0_73 = arith.constant 0 : index
    %58 = vector.load %arg7[%c2_71, %c2_72, %c0_73] : memref<18x18x4xf32, #tpu.memory_space<vmem>>, vector<16x16x4xf32>
    %59 = vector.shape_cast %58 : vector<16x16x4xf32> to vector<256x4xf32>
    %60 = arith.truncf %59 : vector<256x4xf32> to vector<256x4xbf16>
    %c0_74 = arith.constant 0 : index
    %c8_75 = arith.constant 8 : index
    %61 = vector.load %arg8[%c0_74, %c8_75] : memref<256x12xbf16, #tpu.memory_space<vmem>>, vector<256x4xbf16>
    tpu.vector_store %arg8[%c0_74, %c8_75], %60 {strides = array<i32>} : memref<256x12xbf16, #tpu.memory_space<vmem>>, vector<256x4xbf16>,
    %c0_76 = arith.constant 0 : index
    %c0_77 = arith.constant 0 : index
    %62 = vector.load %arg8[%c0_76, %c0_77] : memref<256x12xbf16, #tpu.memory_space<vmem>>, vector<256x12xbf16>
    %c2_78 = arith.constant 2 : index
    %c0_79 = arith.constant 0 : index
    %c0_80 = arith.constant 0 : index
    %63 = vector.load %arg4[%c2_78, %c0_79, %c0_80] : memref<3x12x4xbf16, #tpu.memory_space<vmem>>, vector<1x12x4xbf16>
    %64 = vector.shape_cast %63 : vector<1x12x4xbf16> to vector<12x4xbf16>
    %cst_81 = arith.constant dense<0.000000e+00> : vector<256x4xf32>
    %65 = tpu.matmul %62, %64, %cst_81 {dimension_numbers = #tpu.dot_dimension_numbers<[1], [0], [0], [1], [0, 0, 1, 1], [], []>} : vector<256x12xbf16>, vector<12x4xbf16>, vector<256x4xf32> -> vector<256x4xf32>
    %66 = arith.addf %49, %65 : vector<256x4xf32>
    %c0_82 = arith.constant 0 : index
    %c0_83 = arith.constant 0 : index
    %67 = vector.load %arg5[%c0_82, %c0_83] : memref<1x4xf32, #tpu.memory_space<vmem>>, vector<1x4xf32>
    %68 = vector.broadcast %67 : vector<1x4xf32> to vector<256x4xf32>
    %69 = arith.addf %66, %68 : vector<256x4xf32>
    %cst_84 = arith.constant 0.000000e+00 : f32
    %70 = vector.broadcast %cst_84 : f32 to vector<256x4xf32>
    %71 = arith.maximumf %69, %70 : vector<256x4xf32>
    %72 = arith.truncf %71 : vector<256x4xf32> to vector<256x4xbf16>
    %c0_85 = arith.constant 0 : index
    %c0_86 = arith.constant 0 : index
    %73 = vector.load %arg6[%c0_85, %c0_86] : memref<256x4xbf16, #tpu.memory_space<vmem>>, vector<256x4xbf16>
    tpu.vector_store %arg6[%c0_85, %c0_86], %72 {strides = array<i32>} : memref<256x4xbf16, #tpu.memory_space<vmem>>, vector<256x4xbf16>,
    return
  }
  func.func @transform_0(%arg0: i32) -> (i32, i32, i32) {
    %c0_i32 = arith.constant 0 : i32
    %c0_i32_0 = arith.constant 0 : i32
    %c0_i32_1 = arith.constant 0 : i32
    return %arg0, %c0_i32, %c0_i32_0 : i32, i32, i32
  }
  func.func @transform_1(%arg0: i32) -> (i32, i32) {
    %c0_i32 = arith.constant 0 : i32
    %c0_i32_0 = arith.constant 0 : i32
    %c0_i32_1 = arith.constant 0 : i32
    return %c0_i32, %c0_i32_0 : i32, i32
  }
  func.func @transform_2(%arg0: i32) -> (i32, i32) {
    %c0_i32 = arith.constant 0 : i32
    %c0_i32_0 = arith.constant 0 : i32
    %c0_i32_1 = arith.constant 0 : i32
    return %c0_i32, %c0_i32_0 : i32, i32
  }
  func.func @transform_3(%arg0: i32) -> (i32, i32, i32) {
    %c0_i32 = arith.constant 0 : i32
    %c0_i32_0 = arith.constant 0 : i32
    %c0_i32_1 = arith.constant 0 : i32
    %c0_i32_2 = arith.constant 0 : i32
    return %c0_i32, %c0_i32_0, %c0_i32_1 : i32, i32, i32
  }
  func.func @transform_4(%arg0: i32) -> (i32, i32) {
    %c0_i32 = arith.constant 0 : i32
    %c0_i32_0 = arith.constant 0 : i32
    %c0_i32_1 = arith.constant 0 : i32
    return %c0_i32, %c0_i32_0 : i32, i32
  }
  func.func @transform_5(%arg0: i32) -> (i32, i32) {
    %c0_i32 = arith.constant 0 : i32
    %c0_i32_0 = arith.constant 0 : i32
    return %arg0, %c0_i32 : i32, i32
  }
}

</mosaic_0001>

<llo_original>
// kernel: tpu_custom_call.1
$region0: #{tpu_custom_call.1}
  #allocation0 [shape = 'u32[]', space=smem, size = 0x4, offset = 0x4, fixed_abs, tag = 'smem constant byte address 0x4 - core index']
  #allocation1 [shape = 'u32[144,128]{1,0:T(1,128)}', space=vmem, size = 0x12000, scoped, tag = 'internal scratch']
  #allocation2 [shape = 'f32[18,18,4]{2,1,0:T(8,128)}', space=vmem, size = 0x36000, scoped, tag = 'scratch operand']
  #allocation3 [shape = 'bf16[256,12]{1,0:T(16,128)(2,1)}', space=vmem, size = 0x10000, scoped, tag = 'scratch operand']
  %s0 = inlined_call_operand.vmem [shape: bf16[2,256,4], index: 0, kind: input, shape index: {}]
  %s1 = inlined_call_operand.vmem [shape: bf16[4,4], index: 1, kind: input, shape index: {}]
  %s2 = inlined_call_operand.vmem [shape: f32[1,4], index: 2, kind: input, shape index: {}]
  %s3 = inlined_call_operand.vmem [shape: bf16[3,12,4], index: 3, kind: input, shape index: {}]
  %s4 = inlined_call_operand.vmem [shape: f32[1,4], index: 4, kind: input, shape index: {}]
  %s5 = inlined_call_operand.vmem [shape: bf16[512,4], index: 5, kind: output, shape index: {}]
  %s6 = sld [smem:[#allocation0]]
  $region53: #{tpu_custom_call.1} parent=0
    _
  %s8 = ssub.s32 1, %s6
  %s9 = scalar_select 0, %s8, %s6
  loop: start=0, step=1, limit=4
  $region2: #{tpu_custom_call.1} parent=0 // loop_pre_header
    _
  $region3: #{tpu_custom_call.1} parent=0 // loop_header
    %s11 = sphi 0, %s15
    %p12 = scmp.ge.s32.totalorder %s11, 4
    %s21 = sphi 0, %s23
    %s24 = sphi 0, %s21
    %s25 = sphi 0, %s24
    %s41 = sphi 0, %s25
    %s45 = sphi 0, %s45
    %s47 = sphi 0, %s45
    %s48 = sphi 0, %s47
    %s62 = sphi 0, %s48
    %s66 = sphi 0, %s66
    %s68 = sphi 0, %s66
    %s69 = sphi 0, %s68
    %s83 = sphi 0, %s69
    %s87 = sphi 0, %s87
    %s89 = sphi 0, %s87
    %s90 = sphi 0, %s89
    %s104 = sphi 0, %s90
    %s108 = sphi 0, %s108
    %s110 = sphi 0, %s108
    %s111 = sphi 0, %s110
    %s125 = sphi 0, %s111
    %s131 = sphi 0, %s133
    %s134 = sphi 0, %s131
    %s135 = sphi 0, %s134
    %s151 = sphi 0, %s135
  $region4: #{tpu_custom_call.1} parent=0 // loop_header_branch
    %14 = sbr.rel (%p12) target = $region8
  $region5: #{tpu_custom_call.1} parent=0 // loop_body
    %s16 = ssub.s32 %s11, 1
    %s17 = ssub.s32 %s11, 2
    %s18 = sadd.s32 %s11, 1
    %s19 = ssub.s32 %s11, %s18
    %p20 = scmp.eq.s32.totalorder %s19, 0
    %s22 = sadd.s32 %s21, 1
    %s23 = scalar_select %p20, %s21, %s22
    %p26 = pneg %p20
    %p27 = scmp.eq.s32.totalorder %s11, 1
    %p28 = por %p26, %p27
    %p29 = scmp.ne.s32.totalorder %s21, %s24
    %p30 = scmp.eq.s32.totalorder %s11, 0
    %p31 = por %p29, %p30
    %p32 = scmp.ne.s32.totalorder %s21, %s24
    %p33 = scmp.eq.s32.totalorder %s16, 1
    %p34 = por %p32, %p33
    %p35 = scmp.ne.s32.totalorder %s24, %s25
    %p36 = scmp.eq.s32.totalorder %s16, 0
    %p37 = por %p35, %p36
    %p38 = scmp.ne.s32.totalorder %s24, %s25
    %p39 = scmp.eq.s32.totalorder %s17, 1
    %p40 = por %p38, %p39
    %p42 = scmp.ne.s32.totalorder %s25, %s41
    %p43 = scmp.eq.s32.totalorder %s17, 0
    %p44 = por %p42, %p43
    %s46 = sadd.s32 %s45, 1
    %p49 = scmp.eq.s32.totalorder %s11, 1
    %p50 = scmp.ne.s32.totalorder %s45, %s47
    %p51 = scmp.eq.s32.totalorder %s11, 0
    %p52 = por %p50, %p51
    %p53 = scmp.ne.s32.totalorder %s45, %s47
    %p54 = scmp.eq.s32.totalorder %s16, 1
    %p55 = por %p53, %p54
    %p56 = scmp.ne.s32.totalorder %s47, %s48
    %p57 = scmp.eq.s32.totalorder %s16, 0
    %p58 = por %p56, %p57
    %p59 = scmp.ne.s32.totalorder %s47, %s48
    %p60 = scmp.eq.s32.totalorder %s17, 1
    %p61 = por %p59, %p60
    %p63 = scmp.ne.s32.totalorder %s48, %s62
    %p64 = scmp.eq.s32.totalorder %s17, 0
    %p65 = por %p63, %p64
    %s67 = sadd.s32 %s66, 1
    %p70 = scmp.eq.s32.totalorder %s11, 1
    %p71 = scmp.ne.s32.totalorder %s66, %s68
    %p72 = scmp.eq.s32.totalorder %s11, 0
    %p73 = por %p71, %p72
    %p74 = scmp.ne.s32.totalorder %s66, %s68
    %p75 = scmp.eq.s32.totalorder %s16, 1
    %p76 = por %p74, %p75
    %p77 = scmp.ne.s32.totalorder %s68, %s69
    %p78 = scmp.eq.s32.totalorder %s16, 0
    %p79 = por %p77, %p78
    %p80 = scmp.ne.s32.totalorder %s68, %s69
    %p81 = scmp.eq.s32.totalorder %s17, 1
    %p82 = por %p80, %p81
    %p84 = scmp.ne.s32.totalorder %s69, %s83
    %p85 = scmp.eq.s32.totalorder %s17, 0
    %p86 = por %p84, %p85
    %s88 = sadd.s32 %s87, 1
    %p91 = scmp.eq.s32.totalorder %s11, 1
    %p92 = scmp.ne.s32.totalorder %s87, %s89
    %p93 = scmp.eq.s32.totalorder %s11, 0
    %p94 = por %p92, %p93
    %p95 = scmp.ne.s32.totalorder %s87, %s89
    %p96 = scmp.eq.s32.totalorder %s16, 1
    %p97 = por %p95, %p96
    %p98 = scmp.ne.s32.totalorder %s89, %s90
    %p99 = scmp.eq.s32.totalorder %s16, 0
    %p100 = por %p98, %p99
    %p101 = scmp.ne.s32.totalorder %s89, %s90
    %p102 = scmp.eq.s32.totalorder %s17, 1
    %p103 = por %p101, %p102
    %p105 = scmp.ne.s32.totalorder %s90, %s104
    %p106 = scmp.eq.s32.totalorder %s17, 0
    %p107 = por %p105, %p106
    %s109 = sadd.s32 %s108, 1
    %p112 = scmp.eq.s32.totalorder %s11, 1
    %p113 = scmp.ne.s32.totalorder %s108, %s110
    %p114 = scmp.eq.s32.totalorder %s11, 0
    %p115 = por %p113, %p114
    %p116 = scmp.ne.s32.totalorder %s108, %s110
    %p117 = scmp.eq.s32.totalorder %s16, 1
    %p118 = por %p116, %p117
    %p119 = scmp.ne.s32.totalorder %s110, %s111
    %p120 = scmp.eq.s32.totalorder %s16, 0
    %p121 = por %p119, %p120
    %p122 = scmp.ne.s32.totalorder %s110, %s111
    %p123 = scmp.eq.s32.totalorder %s17, 1
    %p124 = por %p122, %p123
    %p126 = scmp.ne.s32.totalorder %s111, %s125
    %p127 = scmp.eq.s32.totalorder %s17, 0
    %p128 = por %p126, %p127
    %s129 = ssub.s32 %s11, %s18
    %p130 = scmp.eq.s32.totalorder %s129, 0
    %s132 = sadd.s32 %s131, 1
    %s133 = scalar_select %p130, %s131, %s132
    %p136 = pneg %p130
    %p137 = scmp.eq.s32.totalorder %s11, 1
    %p138 = por %p136, %p137
    %p139 = scmp.ne.s32.totalorder %s131, %s134
    %p140 = scmp.eq.s32.totalorder %s11, 0
    %p141 = por %p139, %p140
    %p142 = scmp.ne.s32.totalorder %s131, %s134
    %p143 = scmp.eq.s32.totalorder %s16, 1
    %p144 = por %p142, %p143
    %p145 = scmp.ne.s32.totalorder %s134, %s135
    %p146 = scmp.eq.s32.totalorder %s16, 0
    %p147 = por %p145, %p146
    %p148 = scmp.ne.s32.totalorder %s134, %s135
    %p149 = scmp.eq.s32.totalorder %s17, 1
    %p150 = por %p148, %p149
    %p152 = scmp.ne.s32.totalorder %s135, %s151
    %p153 = scmp.eq.s32.totalorder %s17, 0
    %p154 = por %p152, %p153
    %p155 = scmp.le.s32.totalorder 1, %s11
    %p156 = scmp.lt.s32.totalorder %s11, 3
    %p157 = pnand %p155, %p156
    %p158 = pneg %p157
    // Predicated region
    $region9: #{tpu_custom_call.1} parent=5 // pred_check
      _
    $region10: #{tpu_custom_call.1} parent=5 // pred_check_branch
      %160 = sbr.rel (%p157) target = $region12
    $region11: #{tpu_custom_call.1} parent=5 // pred_region
      %s161 = ssub.s32 %s11, 1
      // Predicated region
      $region13: #{tpu_custom_call.1} parent=11 // pred_check
        %p162 = pneg %p58
      $region14: #{tpu_custom_call.1} parent=11 // pred_check_branch
        %164 = sbr.rel (%p162) target = $region16
      $region15: #{tpu_custom_call.1} parent=11 // pred_region
        _
      $region16: #{tpu_custom_call.1} parent=11 // pred_fallthru
        _
      // Predicated region
      $region17: #{tpu_custom_call.1} parent=11 // pred_check
        %p165 = pneg %p79
      $region18: #{tpu_custom_call.1} parent=11 // pred_check_branch
        %167 = sbr.rel (%p165) target = $region20
      $region19: #{tpu_custom_call.1} parent=11 // pred_region
        _
      $region20: #{tpu_custom_call.1} parent=11 // pred_fallthru
        _
      // Predicated region
      $region21: #{tpu_custom_call.1} parent=11 // pred_check
        %p168 = pneg %p100
      $region22: #{tpu_custom_call.1} parent=11 // pred_check_branch
        %170 = sbr.rel (%p168) target = $region24
      $region23: #{tpu_custom_call.1} parent=11 // pred_region
        _
      $region24: #{tpu_custom_call.1} parent=11 // pred_fallthru
        _
      // Predicated region
      $region25: #{tpu_custom_call.1} parent=11 // pred_check
        %p171 = pneg %p121
      $region26: #{tpu_custom_call.1} parent=11 // pred_check_branch
        %173 = sbr.rel (%p171) target = $region28
      $region27: #{tpu_custom_call.1} parent=11 // pred_region
        _
      $region28: #{tpu_custom_call.1} parent=11 // pred_fallthru
        _
    $region12: #{tpu_custom_call.1} parent=5 // pred_fallthru
      _
    %p174 = scmp.lt.s32.totalorder %s11, 2
    // Predicated region
    $region29: #{tpu_custom_call.1} parent=5 // pred_check
      %p175 = pneg %p174
    $region30: #{tpu_custom_call.1} parent=5 // pred_check_branch
      %177 = sbr.rel (%p175) target = $region32
    $region31: #{tpu_custom_call.1} parent=5 // pred_region
      // Predicated region
      $region33: #{tpu_custom_call.1} parent=31 // pred_check
        %p178 = pneg %p31
      $region34: #{tpu_custom_call.1} parent=31 // pred_check_branch
        %180 = sbr.rel (%p178) target = $region36
      $region35: #{tpu_custom_call.1} parent=31 // pred_region
        %p181 = scmp.lt.s32.totalorder %s11, 1
        %s182 = scalar_select %p181, %s11, 1
        %s183 = smul.addr %s182, 32
        %s184 = smul.addr %s183, 4
        %s185 = scalar_lea.vmem %s0, %s184
      $region36: #{tpu_custom_call.1} parent=31 // pred_fallthru
        _
    $region32: #{tpu_custom_call.1} parent=5 // pred_fallthru
      _
    %p186 = scmp.le.s32.totalorder 1, %s11
    %p187 = scmp.lt.s32.totalorder %s11, 3
    %p188 = pnand %p186, %p187
    %p189 = pneg %p188
    // Predicated region
    $region37: #{tpu_custom_call.1} parent=5 // pred_check
      _
    $region38: #{tpu_custom_call.1} parent=5 // pred_check_branch
      %191 = sbr.rel (%p188) target = $region40
    $region39: #{tpu_custom_call.1} parent=5 // pred_region
      %s192 = ssub.s32 %s11, 1
      %p193 = scmp.lt.s32.totalorder %s16, 1
      %s194 = scalar_select %p193, %s16, 1
      %s195 = smul.addr %s194, 32
      %s196 = smul.addr %s195, 4
      %s197 = scalar_lea.vmem %s0, %s196
      %p198 = pneg %p37
      %p199 = pneg %p34
      %p200 = pneg %p58
      %p201 = pneg %p55
      %p202 = pneg %p79
      %p203 = pneg %p76
      %p204 = pneg %p100
      %p205 = pneg %p97
      %p206 = pneg %p121
      %p207 = pneg %p118
      %p208 = pneg %p147
      %p209 = pneg %p144
      %s210 = smul.u32 32, %s16
      %p211 = scmp.lt.s32.totalorder %s210, 63
      %s212 = scalar_select %p211, %s210, 63
      %s213 = smul.addr %s212, 4
      %s214 = scalar_lea.vmem %s5, %s213
      %p215 = scmp.lt.s32.totalorder %s16, 1
      %s216 = scalar_select %p215, %s16, 1
      %s217 = smul.addr %s216, 32
      %s218 = smul.addr %s217, 4
      %s219 = scalar_lea.vmem %s0, %s218
      %s220 = smul.u32 32, %s16
      %p221 = scmp.lt.s32.totalorder %s220, 63
      %s222 = scalar_select %p221, %s220, 63
      %s223 = smul.addr %s222, 4
      %s224 = scalar_lea.vmem %s5, %s223
      %s225 = smul.u32 32, %s16
      %v227 = vld [vmem:[%s219] sm:$0xf]
      %v228 = vld [vmem:[%s219 + $0x4] sm:$0xf]
      %v229 = vld [vmem:[%s219 + $0x8] sm:$0xf]
      %v230 = vld [vmem:[%s219 + $0xc] sm:$0xf]
      %v231 = vld [vmem:[%s219 + $0x10] sm:$0xf]
      %v232 = vld [vmem:[%s219 + $0x14] sm:$0xf]
      %v233 = vld [vmem:[%s219 + $0x18] sm:$0xf]
      %v234 = vld [vmem:[%s219 + $0x1c] sm:$0xf]
      %v235 = vld [vmem:[%s219 + $0x20] sm:$0xf]
      %v236 = vld [vmem:[%s219 + $0x24] sm:$0xf]
      %v237 = vld [vmem:[%s219 + $0x28] sm:$0xf]
      %v238 = vld [vmem:[%s219 + $0x2c] sm:$0xf]
      %v239 = vld [vmem:[%s219 + $0x30] sm:$0xf]
      %v240 = vld [vmem:[%s219 + $0x34] sm:$0xf]
      %v241 = vld [vmem:[%s219 + $0x38] sm:$0xf]
      %v242 = vld [vmem:[%s219 + $0x3c] sm:$0xf]
      %v243 = vld [vmem:[%s219 + $0x40] sm:$0xf]
      %v244 = vld [vmem:[%s219 + $0x44] sm:$0xf]
      %v245 = vld [vmem:[%s219 + $0x48] sm:$0xf]
      %v246 = vld [vmem:[%s219 + $0x4c] sm:$0xf]
      %v247 = vld [vmem:[%s219 + $0x50] sm:$0xf]
      %v248 = vld [vmem:[%s219 + $0x54] sm:$0xf]
      %v249 = vld [vmem:[%s219 + $0x58] sm:$0xf]
      %v250 = vld [vmem:[%s219 + $0x5c] sm:$0xf]
      %v251 = vld [vmem:[%s219 + $0x60] sm:$0xf]
      %v252 = vld [vmem:[%s219 + $0x64] sm:$0xf]
      %v253 = vld [vmem:[%s219 + $0x68] sm:$0xf]
      %v254 = vld [vmem:[%s219 + $0x6c] sm:$0xf]
      %v255 = vld [vmem:[%s219 + $0x70] sm:$0xf]
      %v256 = vld [vmem:[%s219 + $0x74] sm:$0xf]
      %v257 = vld [vmem:[%s219 + $0x78] sm:$0xf]
      %v258 = vld [vmem:[%s219 + $0x7c] sm:$0xf]
      %v259 = vld [vmem:[%s1] sm:$0x3]
      %v260 = vld [vmem:[%s2] sm:$0x1]
      %v262 = vlaneseq
      %v263 = vshrl.u32 %v262, 7
      %v264 = vsub.s32 0, %v263
      %v265 = vrot.slane %v260, %v264
      %v299 = vunpack.c.l.b16 %v227
      %v300 = vunpack.c.l.b16 %v228
      %v301 = vunpack.c.l.b16 %v229
      %v302 = vunpack.c.l.b16 %v230
      %v303 = vunpack.c.l.b16 %v231
      %v304 = vunpack.c.l.b16 %v232
      %v305 = vunpack.c.l.b16 %v233
      %v306 = vunpack.c.l.b16 %v234
      %v307 = vunpack.c.l.b16 %v235
      %v308 = vunpack.c.l.b16 %v236
      %v309 = vunpack.c.l.b16 %v237
      %v310 = vunpack.c.l.b16 %v238
      %v311 = vunpack.c.l.b16 %v239
      %v312 = vunpack.c.l.b16 %v240
      %v313 = vunpack.c.l.b16 %v241
      %v314 = vunpack.c.l.b16 %v242
      %v315 = vunpack.c.l.b16 %v243
      %v316 = vunpack.c.l.b16 %v244
      %v317 = vunpack.c.l.b16 %v245
      %v318 = vunpack.c.l.b16 %v246
      %v319 = vunpack.c.l.b16 %v247
      %v320 = vunpack.c.l.b16 %v248
      %v321 = vunpack.c.l.b16 %v249
      %v322 = vunpack.c.l.b16 %v250
      %v323 = vunpack.c.l.b16 %v251
      %v324 = vunpack.c.l.b16 %v252
      %v325 = vunpack.c.l.b16 %v253
      %v326 = vunpack.c.l.b16 %v254
      %v327 = vunpack.c.l.b16 %v255
      %v328 = vunpack.c.l.b16 %v256
      %v329 = vunpack.c.l.b16 %v257
      %v330 = vunpack.c.l.b16 %v258
      %v331 = vpack.c.b16 %v300, %v299
      %v332 = vpack.c.b16 %v302, %v301
      %v333 = vpack.c.b16 %v304, %v303
      %v334 = vpack.c.b16 %v306, %v305
      %v335 = vpack.c.b16 %v308, %v307
      %v336 = vpack.c.b16 %v310, %v309
      %v337 = vpack.c.b16 %v312, %v311
      %v338 = vpack.c.b16 %v314, %v313
      %v339 = vpack.c.b16 %v316, %v315
      %v340 = vpack.c.b16 %v318, %v317
      %v341 = vpack.c.b16 %v320, %v319
      %v342 = vpack.c.b16 %v322, %v321
      %v343 = vpack.c.b16 %v324, %v323
      %v344 = vpack.c.b16 %v326, %v325
      %v345 = vpack.c.b16 %v328, %v327
      %v346 = vpack.c.b16 %v330, %v329
      %vm347 = vcmask 31744
      %v349 = vsel %vm347, %v331, 0
      %v352 = vsel %vm347, %v332, 0
      %v355 = vsel %vm347, %v333, 0
      %v358 = vsel %vm347, %v334, 0
      %v361 = vsel %vm347, %v335, 0
      %v364 = vsel %vm347, %v336, 0
      %v367 = vsel %vm347, %v337, 0
      %v370 = vsel %vm347, %v338, 0
      %v373 = vsel %vm347, %v339, 0
      %v376 = vsel %vm347, %v340, 0
      %v379 = vsel %vm347, %v341, 0
      %v382 = vsel %vm347, %v342, 0
      %v385 = vsel %vm347, %v343, 0
      %v388 = vsel %vm347, %v344, 0
      %v391 = vsel %vm347, %v345, 0
      %v394 = vsel %vm347, %v346, 0
      %vm396 = vcmask 1041408
      %v398 = vsel %vm396, %v259, 0
      %400 = vmatprep.subr.bf16.mxu0 0
      %401 = vmatpush1.bf16.msra.mxu0 %v398
      %402 = vmatprep.subr.bf16.mxu0 0
      %403 = vmatpush1.bf16.msra.mxu0 0
      %404 = vmatprep.subr.bf16.mxu0 0
      %405 = vmatpush1.bf16.msra.mxu0 0
      %406 = vmatprep.subr.bf16.mxu0 0
      %407 = vmatpush1.bf16.msra.mxu0 0
      %408 = vmatprep.subr.bf16.mxu0 0
      %409 = vmatpush1.bf16.msra.mxu0 0
      %410 = vmatprep.subr.bf16.mxu0 0
      %411 = vmatpush1.bf16.msra.mxu0 0
      %412 = vmatprep.subr.bf16.mxu0 0
      %413 = vmatpush1.bf16.msra.mxu0 0
      %414 = vmatprep.subr.bf16.mxu0 0
      %415 = vmatpush1.bf16.msra.mxu0 0
      %416 = vmatprep.subr.bf16.mxu0 0
      %417 = vmatpush1.bf16.msra.mxu0 0
      %418 = vmatprep.subr.bf16.mxu0 0
      %419 = vmatpush1.bf16.msra.mxu0 0
      %420 = vmatprep.subr.bf16.mxu0 0
      %421 = vmatpush1.bf16.msra.mxu0 0
      %422 = vmatprep.subr.bf16.mxu0 0
      %423 = vmatpush1.bf16.msra.mxu0 0
      %424 = vmatprep.subr.bf16.mxu0 0
      %425 = vmatpush1.bf16.msra.mxu0 0
      %426 = vmatprep.subr.bf16.mxu0 0
      %427 = vmatpush1.bf16.msra.mxu0 0
      %428 = vmatprep.subr.bf16.mxu0 0
      %429 = vmatpush1.bf16.msra.mxu0 0
      %430 = vmatprep.subr.bf16.mxu0 0
      %431 = vmatpush1.bf16.msra.mxu0 0
      %432 = vmatprep.mubr.bf16.mxu0 0
      %433 = vmatmul.mubr.bf16.gmra.mrb[0].mxu0 %v349
      %v434 = vpop.f32.mrb[0].mxu0
      %v435 = vadd.f32 %v265, %v434
      %v436 = vpop.f32.mrb[0].mxu0
      %v437 = vpop.f32.mrb[0].mxu0
      %v438 = vadd.f32 %v265, %v437
      %v439 = vpop.f32.mrb[0].mxu0
      %440 = vmatprep.mubr.bf16.mxu0 0
      %441 = vmatmul.mubr.bf16.gmra.mrb[0].mxu0 %v352
      %v442 = vpop.f32.mrb[0].mxu0
      %v443 = vadd.f32 %v265, %v442
      %v444 = vpop.f32.mrb[0].mxu0
      %v445 = vpop.f32.mrb[0].mxu0
      %v446 = vadd.f32 %v265, %v445
      %v447 = vpop.f32.mrb[0].mxu0
      %448 = vmatprep.mubr.bf16.mxu0 0
      %449 = vmatmul.mubr.bf16.gmra.mrb[0].mxu0 %v355
      %v450 = vpop.f32.mrb[0].mxu0
      %v451 = vadd.f32 %v265, %v450
      %v452 = vpop.f32.mrb[0].mxu0
      %v453 = vpop.f32.mrb[0].mxu0
      %v454 = vadd.f32 %v265, %v453
      %v455 = vpop.f32.mrb[0].mxu0
      %456 = vmatprep.mubr.bf16.mxu0 0
      %457 = vmatmul.mubr.bf16.gmra.mrb[0].mxu0 %v358
      %v458 = vpop.f32.mrb[0].mxu0
      %v459 = vadd.f32 %v265, %v458
      %v460 = vpop.f32.mrb[0].mxu0
      %v461 = vpop.f32.mrb[0].mxu0
      %v462 = vadd.f32 %v265, %v461
      %v463 = vpop.f32.mrb[0].mxu0
      %464 = vmatprep.mubr.bf16.mxu0 0
      %465 = vmatmul.mubr.bf16.gmra.mrb[0].mxu0 %v361
      %v466 = vpop.f32.mrb[0].mxu0
      %v467 = vadd.f32 %v265, %v466
      %v468 = vpop.f32.mrb[0].mxu0
      %v469 = vpop.f32.mrb[0].mxu0
      %v470 = vadd.f32 %v265, %v469
      %v471 = vpop.f32.mrb[0].mxu0
      %472 = vmatprep.mubr.bf16.mxu0 0
      %473 = vmatmul.mubr.bf16.gmra.mrb[0].mxu0 %v364
      %v474 = vpop.f32.mrb[0].mxu0
      %v475 = vadd.f32 %v265, %v474
      %v476 = vpop.f32.mrb[0].mxu0
      %v477 = vpop.f32.mrb[0].mxu0
      %v478 = vadd.f32 %v265, %v477
      %v479 = vpop.f32.mrb[0].mxu0
      %480 = vmatprep.mubr.bf16.mxu0 0
      %481 = vmatmul.mubr.bf16.gmra.mrb[0].mxu0 %v367
      %v482 = vpop.f32.mrb[0].mxu0
      %v483 = vadd.f32 %v265, %v482
      %v484 = vpop.f32.mrb[0].mxu0
      %v485 = vpop.f32.mrb[0].mxu0
      %v486 = vadd.f32 %v265, %v485
      %v487 = vpop.f32.mrb[0].mxu0
      %488 = vmatprep.mubr.bf16.mxu0 0
      %489 = vmatmul.mubr.bf16.gmra.mrb[0].mxu0 %v370
      %v490 = vpop.f32.mrb[0].mxu0
      %v491 = vadd.f32 %v265, %v490
      %v492 = vpop.f32.mrb[0].mxu0
      %v493 = vpop.f32.mrb[0].mxu0
      %v494 = vadd.f32 %v265, %v493
      %v495 = vpop.f32.mrb[0].mxu0
      %496 = vmatprep.mubr.bf16.mxu0 0
      %497 = vmatmul.mubr.bf16.gmra.mrb[0].mxu0 %v373
      %v498 = vpop.f32.mrb[0].mxu0
      %v499 = vadd.f32 %v265, %v498
      %v500 = vpop.f32.mrb[0].mxu0
      %v501 = vpop.f32.mrb[0].mxu0
      %v502 = vadd.f32 %v265, %v501
      %v503 = vpop.f32.mrb[0].mxu0
      %504 = vmatprep.mubr.bf16.mxu0 0
      %505 = vmatmul.mubr.bf16.gmra.mrb[0].mxu0 %v376
      %v506 = vpop.f32.mrb[0].mxu0
      %v507 = vadd.f32 %v265, %v506
      %v508 = vpop.f32.mrb[0].mxu0
      %v509 = vpop.f32.mrb[0].mxu0
      %v510 = vadd.f32 %v265, %v509
      %v511 = vpop.f32.mrb[0].mxu0
      %512 = vmatprep.mubr.bf16.mxu0 0
      %513 = vmatmul.mubr.bf16.gmra.mrb[0].mxu0 %v379
      %v514 = vpop.f32.mrb[0].mxu0
      %v515 = vadd.f32 %v265, %v514
      %v516 = vpop.f32.mrb[0].mxu0
      %v517 = vpop.f32.mrb[0].mxu0
      %v518 = vadd.f32 %v265, %v517
      %v519 = vpop.f32.mrb[0].mxu0
      %520 = vmatprep.mubr.bf16.mxu0 0
      %521 = vmatmul.mubr.bf16.gmra.mrb[0].mxu0 %v382
      %v522 = vpop.f32.mrb[0].mxu0
      %v523 = vadd.f32 %v265, %v522
      %v524 = vpop.f32.mrb[0].mxu0
      %v525 = vpop.f32.mrb[0].mxu0
      %v526 = vadd.f32 %v265, %v525
      %v527 = vpop.f32.mrb[0].mxu0
      %528 = vmatprep.mubr.bf16.mxu0 0
      %529 = vmatmul.mubr.bf16.gmra.mrb[0].mxu0 %v385
      %v530 = vpop.f32.mrb[0].mxu0
      %v531 = vadd.f32 %v265, %v530
      %v532 = vpop.f32.mrb[0].mxu0
      %v533 = vpop.f32.mrb[0].mxu0
      %v534 = vadd.f32 %v265, %v533
      %v535 = vpop.f32.mrb[0].mxu0
      %536 = vmatprep.mubr.bf16.mxu0 0
      %537 = vmatmul.mubr.bf16.gmra.mrb[0].mxu0 %v388
      %v538 = vpop.f32.mrb[0].mxu0
      %v539 = vadd.f32 %v265, %v538
      %v540 = vpop.f32.mrb[0].mxu0
      %v541 = vpop.f32.mrb[0].mxu0
      %v542 = vadd.f32 %v265, %v541
      %v543 = vpop.f32.mrb[0].mxu0
      %544 = vmatprep.mubr.bf16.mxu0 0
      %545 = vmatmul.mubr.bf16.gmra.mrb[0].mxu0 %v391
      %v546 = vpop.f32.mrb[0].mxu0
      %v547 = vadd.f32 %v265, %v546
      %v548 = vpop.f32.mrb[0].mxu0
      %v549 = vpop.f32.mrb[0].mxu0
      %v550 = vadd.f32 %v265, %v549
      %v551 = vpop.f32.mrb[0].mxu0
      %552 = vmatprep.mubr.bf16.mxu0 0
      %553 = vmatmul.mubr.bf16.gmra.mrb[0].mxu0 %v394
      %v554 = vpop.f32.mrb[0].mxu0
      %v555 = vadd.f32 %v265, %v554
      %v556 = vpop.f32.mrb[0].mxu0
      %v557 = vpop.f32.mrb[0].mxu0
      %v558 = vadd.f32 %v265, %v557
      %v559 = vpop.f32.mrb[0].mxu0
      %560 = vdwg.mxu0
      %v561 = vmax.f32 %v435, 0.0
      %v562 = vmax.f32 %v438, 0.0
      %v563 = vmax.f32 %v443, 0.0
      %v564 = vmax.f32 %v446, 0.0
      %v565 = vmax.f32 %v451, 0.0
      %v566 = vmax.f32 %v454, 0.0
      %v567 = vmax.f32 %v459, 0.0
      %v568 = vmax.f32 %v462, 0.0
      %v569 = vmax.f32 %v467, 0.0
      %v570 = vmax.f32 %v470, 0.0
      %v571 = vmax.f32 %v475, 0.0
      %v572 = vmax.f32 %v478, 0.0
      %v573 = vmax.f32 %v483, 0.0
      %v574 = vmax.f32 %v486, 0.0
      %v575 = vmax.f32 %v491, 0.0
      %v576 = vmax.f32 %v494, 0.0
      %v577 = vmax.f32 %v499, 0.0
      %v578 = vmax.f32 %v502, 0.0
      %v579 = vmax.f32 %v507, 0.0
      %v580 = vmax.f32 %v510, 0.0
      %v581 = vmax.f32 %v515, 0.0
      %v582 = vmax.f32 %v518, 0.0
      %v583 = vmax.f32 %v523, 0.0
      %v584 = vmax.f32 %v526, 0.0
      %v585 = vmax.f32 %v531, 0.0
      %v586 = vmax.f32 %v534, 0.0
      %v587 = vmax.f32 %v539, 0.0
      %v588 = vmax.f32 %v542, 0.0
      %v589 = vmax.f32 %v547, 0.0
      %v590 = vmax.f32 %v550, 0.0
      %v591 = vmax.f32 %v555, 0.0
      %v592 = vmax.f32 %v558, 0.0
      %593 = vst.msk [vmem:[#allocation2] sm:$0xff] %vm347, 0.0
      %594 = vst.msk [vmem:[#allocation2 + $0x8] sm:$0xff] %vm347, 0.0
      %vm595 = vcmask 25600
      %596 = vst.msk [vmem:[#allocation2 + $0x10] sm:$0x3] %vm595, 0.0
      %s597 = scalar_lea.vmem [#allocation2], 408
      %598 = vst.msk [vmem:[%s597] sm:$0xff] %vm347, 0.0
      %599 = vst.msk [vmem:[%s597 + $0x8] sm:$0xff] %vm347, 0.0
      %600 = vst.msk [vmem:[%s597 + $0x10] sm:$0x3] %vm595, 0.0
      %s601 = scalar_lea.vmem [#allocation2], 24
      %vm602 = vcmask 24576
      %603 = vst.msk [vmem:[%s601] sm:$0x1] %vm602, 0.0
      %604 = vst.msk [vmem:[%s601 + $0x18] sm:$0x1] %vm602, 0.0
      %605 = vst.msk [vmem:[%s601 + $0x30] sm:$0x1] %vm602, 0.0
      %606 = vst.msk [vmem:[%s601 + $0x48] sm:$0x1] %vm602, 0.0
      %607 = vst.msk [vmem:[%s601 + $0x60] sm:$0x1] %vm602, 0.0
      %608 = vst.msk [vmem:[%s601 + $0x78] sm:$0x1] %vm602, 0.0
      %609 = vst.msk [vmem:[%s601 + $0x90] sm:$0x1] %vm602, 0.0
      %610 = vst.msk [vmem:[%s601 + $0xa8] sm:$0x1] %vm602, 0.0
      %611 = vst.msk [vmem:[%s601 + $0xc0] sm:$0x1] %vm602, 0.0
      %612 = vst.msk [vmem:[%s601 + $0xd8] sm:$0x1] %vm602, 0.0
      %613 = vst.msk [vmem:[%s601 + $0xf0] sm:$0x1] %vm602, 0.0
      %614 = vst.msk [vmem:[%s601 + $0x108] sm:$0x1] %vm602, 0.0
      %615 = vst.msk [vmem:[%s601 + $0x120] sm:$0x1] %vm602, 0.0
      %616 = vst.msk [vmem:[%s601 + $0x138] sm:$0x1] %vm602, 0.0
      %617 = vst.msk [vmem:[%s601 + $0x150] sm:$0x1] %vm602, 0.0
      %618 = vst.msk [vmem:[%s601 + $0x168] sm:$0x1] %vm602, 0.0
      %619 = vst.msk [vmem:[%s601 + $0x11] sm:$0x1] %vm602, 0.0
      %620 = vst.msk [vmem:[%s601 + $0x29] sm:$0x1] %vm602, 0.0
      %621 = vst.msk [vmem:[%s601 + $0x41] sm:$0x1] %vm602, 0.0
      %622 = vst.msk [vmem:[%s601 + $0x59] sm:$0x1] %vm602, 0.0
      %623 = vst.msk [vmem:[%s601 + $0x71] sm:$0x1] %vm602, 0.0
      %624 = vst.msk [vmem:[%s601 + $0x89] sm:$0x1] %vm602, 0.0
      %625 = vst.msk [vmem:[%s601 + $0xa1] sm:$0x1] %vm602, 0.0
      %626 = vst.msk [vmem:[%s601 + $0xb9] sm:$0x1] %vm602, 0.0
      %627 = vst.msk [vmem:[%s601 + $0xd1] sm:$0x1] %vm602, 0.0
      %628 = vst.msk [vmem:[%s601 + $0xe9] sm:$0x1] %vm602, 0.0
      %629 = vst.msk [vmem:[%s601 + $0x101] sm:$0x1] %vm602, 0.0
      %630 = vst.msk [vmem:[%s601 + $0x119] sm:$0x1] %vm602, 0.0
      %631 = vst.msk [vmem:[%s601 + $0x131] sm:$0x1] %vm602, 0.0
      %632 = vst.msk [vmem:[%s601 + $0x149] sm:$0x1] %vm602, 0.0
      %633 = vst.msk [vmem:[%s601 + $0x161] sm:$0x1] %vm602, 0.0
      %634 = vst.msk [vmem:[%s601 + $0x179] sm:$0x1] %vm602, 0.0
      %635 = vst.msk [vmem:[%s601 + $0x1] sm:$0xff] %vm347, %v561
      %636 = vst.msk [vmem:[%s601 + $0x9] sm:$0xff] %vm347, %v562
      %637 = vst.msk [vmem:[%s601 + $0x19] sm:$0xff] %vm347, %v563
      %638 = vst.msk [vmem:[%s601 + $0x21] sm:$0xff] %vm347, %v564
      %639 = vst.msk [vmem:[%s601 + $0x31] sm:$0xff] %vm347, %v565
      %640 = vst.msk [vmem:[%s601 + $0x39] sm:$0xff] %vm347, %v566
      %641 = vst.msk [vmem:[%s601 + $0x49] sm:$0xff] %vm347, %v567
      %642 = vst.msk [vmem:[%s601 + $0x51] sm:$0xff] %vm347, %v568
      %643 = vst.msk [vmem:[%s601 + $0x61] sm:$0xff] %vm347, %v569
      %644 = vst.msk [vmem:[%s601 + $0x69] sm:$0xff] %vm347, %v570
      %645 = vst.msk [vmem:[%s601 + $0x79] sm:$0xff] %vm347, %v571
      %646 = vst.msk [vmem:[%s601 + $0x81] sm:$0xff] %vm347, %v572
      %647 = vst.msk [vmem:[%s601 + $0x91] sm:$0xff] %vm347, %v573
      %648 = vst.msk [vmem:[%s601 + $0x99] sm:$0xff] %vm347, %v574
      %649 = vst.msk [vmem:[%s601 + $0xa9] sm:$0xff] %vm347, %v575
      %650 = vst.msk [vmem:[%s601 + $0xb1] sm:$0xff] %vm347, %v576
      %651 = vst.msk [vmem:[%s601 + $0xc1] sm:$0xff] %vm347, %v577
      %652 = vst.msk [vmem:[%s601 + $0xc9] sm:$0xff] %vm347, %v578
      %653 = vst.msk [vmem:[%s601 + $0xd9] sm:$0xff] %vm347, %v579
      %654 = vst.msk [vmem:[%s601 + $0xe1] sm:$0xff] %vm347, %v580
      %655 = vst.msk [vmem:[%s601 + $0xf1] sm:$0xff] %vm347, %v581
      %656 = vst.msk [vmem:[%s601 + $0xf9] sm:$0xff] %vm347, %v582
      %657 = vst.msk [vmem:[%s601 + $0x109] sm:$0xff] %vm347, %v583
      %658 = vst.msk [vmem:[%s601 + $0x111] sm:$0xff] %vm347, %v584
      %659 = vst.msk [vmem:[%s601 + $0x121] sm:$0xff] %vm347, %v585
      %660 = vst.msk [vmem:[%s601 + $0x129] sm:$0xff] %vm347, %v586
      %661 = vst.msk [vmem:[%s601 + $0x139] sm:$0xff] %vm347, %v587
      %662 = vst.msk [vmem:[%s601 + $0x141] sm:$0xff] %vm347, %v588
      %663 = vst.msk [vmem:[%s601 + $0x151] sm:$0xff] %vm347, %v589
      %664 = vst.msk [vmem:[%s601 + $0x159] sm:$0xff] %vm347, %v590
      %665 = vst.msk [vmem:[%s601 + $0x169] sm:$0xff] %vm347, %v591
      %666 = vst.msk [vmem:[%s601 + $0x171] sm:$0xff] %vm347, %v592
      %v667 = vld [vmem:[#allocation2] sm:$0xff]
      %v668 = vld [vmem:[#allocation2 + $0x8] sm:$0xff]
      %v669 = vld [vmem:[#allocation2 + $0x18] sm:$0xff]
      %v670 = vld [vmem:[#allocation2 + $0x20] sm:$0xff]
      %v671 = vld [vmem:[#allocation2 + $0x30] sm:$0xff]
      %v672 = vld [vmem:[#allocation2 + $0x38] sm:$0xff]
      %v673 = vld [vmem:[#allocation2 + $0x48] sm:$0xff]
      %v674 = vld [vmem:[#allocation2 + $0x50] sm:$0xff]
      %v675 = vld [vmem:[#allocation2 + $0x60] sm:$0xff]
      %v676 = vld [vmem:[#allocation2 + $0x68] sm:$0xff]
      %v677 = vld [vmem:[#allocation2 + $0x78] sm:$0xff]
      %v678 = vld [vmem:[#allocation2 + $0x80] sm:$0xff]
      %v679 = vld [vmem:[#allocation2 + $0x90] sm:$0xff]
      %v680 = vld [vmem:[#allocation2 + $0x98] sm:$0xff]
      %v681 = vld [vmem:[#allocation2 + $0xa8] sm:$0xff]
      %v682 = vld [vmem:[#allocation2 + $0xb0] sm:$0xff]
      %v683 = vld [vmem:[#allocation2 + $0xc0] sm:$0xff]
      %v684 = vld [vmem:[#allocation2 + $0xc8] sm:$0xff]
      %v685 = vld [vmem:[#allocation2 + $0xd8] sm:$0xff]
      %v686 = vld [vmem:[#allocation2 + $0xe0] sm:$0xff]
      %v687 = vld [vmem:[#allocation2 + $0xf0] sm:$0xff]
      %v688 = vld [vmem:[#allocation2 + $0xf8] sm:$0xff]
      %v689 = vld [vmem:[#allocation2 + $0x108] sm:$0xff]
      %v690 = vld [vmem:[#allocation2 + $0x110] sm:$0xff]
      %v691 = vld [vmem:[#allocation2 + $0x120] sm:$0xff]
      %v692 = vld [vmem:[#allocation2 + $0x128] sm:$0xff]
      %v693 = vld [vmem:[#allocation2 + $0x138] sm:$0xff]
      %v694 = vld [vmem:[#allocation2 + $0x140] sm:$0xff]
      %v695 = vld [vmem:[#allocation2 + $0x150] sm:$0xff]
      %v696 = vld [vmem:[#allocation2 + $0x158] sm:$0xff]
      %v697 = vld [vmem:[#allocation2 + $0x168] sm:$0xff]
      %v698 = vld [vmem:[#allocation2 + $0x170] sm:$0xff]
      %v699 = vpack.c.bf16 %v668, %v667
      %v700 = vpack.c.bf16 %v670, %v669
      %v701 = vpack.c.bf16 %v672, %v671
      %v702 = vpack.c.bf16 %v674, %v673
      %v703 = vpack.c.bf16 %v676, %v675
      %v704 = vpack.c.bf16 %v678, %v677
      %v705 = vpack.c.bf16 %v680, %v679
      %v706 = vpack.c.bf16 %v682, %v681
      %v707 = vpack.c.bf16 %v684, %v683
      %v708 = vpack.c.bf16 %v686, %v685
      %v709 = vpack.c.bf16 %v688, %v687
      %v710 = vpack.c.bf16 %v690, %v689
      %v711 = vpack.c.bf16 %v692, %v691
      %v712 = vpack.c.bf16 %v694, %v693
      %v713 = vpack.c.bf16 %v696, %v695
      %v714 = vpack.c.bf16 %v698, %v697
      %715 = vst.msk [vmem:[#allocation3] sm:$0xff] %vm347, %v699
      %716 = vst.msk [vmem:[#allocation3 + $0x8] sm:$0xff] %vm347, %v700
      %717 = vst.msk [vmem:[#allocation3 + $0x10] sm:$0xff] %vm347, %v701
      %718 = vst.msk [vmem:[#allocation3 + $0x18] sm:$0xff] %vm347, %v702
      %719 = vst.msk [vmem:[#allocation3 + $0x20] sm:$0xff] %vm347, %v703
      %720 = vst.msk [vmem:[#allocation3 + $0x28] sm:$0xff] %vm347, %v704
      %721 = vst.msk [vmem:[#allocation3 + $0x30] sm:$0xff] %vm347, %v705
      %722 = vst.msk [vmem:[#allocation3 + $0x38] sm:$0xff] %vm347, %v706
      %723 = vst.msk [vmem:[#allocation3 + $0x40] sm:$0xff] %vm347, %v707
      %724 = vst.msk [vmem:[#allocation3 + $0x48] sm:$0xff] %vm347, %v708
      %725 = vst.msk [vmem:[#allocation3 + $0x50] sm:$0xff] %vm347, %v709
      %726 = vst.msk [vmem:[#allocation3 + $0x58] sm:$0xff] %vm347, %v710
      %727 = vst.msk [vmem:[#allocation3 + $0x60] sm:$0xff] %vm347, %v711
      %728 = vst.msk [vmem:[#allocation3 + $0x68] sm:$0xff] %vm347, %v712
      %729 = vst.msk [vmem:[#allocation3 + $0x70] sm:$0xff] %vm347, %v713
      %730 = vst.msk [vmem:[#allocation3 + $0x78] sm:$0xff] %vm347, %v714
      %v731 = vld [vmem:[#allocation2 + $0x1] sm:$0xff]
      %v732 = vld [vmem:[#allocation2 + $0x9] sm:$0xff]
      %v733 = vld [vmem:[#allocation2 + $0x19] sm:$0xff]
      %v734 = vld [vmem:[#allocation2 + $0x21] sm:$0xff]
      %v735 = vld [vmem:[#allocation2 + $0x31] sm:$0xff]
      %v736 = vld [vmem:[#allocation2 + $0x39] sm:$0xff]
      %v737 = vld [vmem:[#allocation2 + $0x49] sm:$0xff]
      %v738 = vld [vmem:[#allocation2 + $0x51] sm:$0xff]
      %v739 = vld [vmem:[#allocation2 + $0x61] sm:$0xff]
      %v740 = vld [vmem:[#allocation2 + $0x69] sm:$0xff]
      %v741 = vld [vmem:[#allocation2 + $0x79] sm:$0xff]
      %v742 = vld [vmem:[#allocation2 + $0x81] sm:$0xff]
      %v743 = vld [vmem:[#allocation2 + $0x91] sm:$0xff]
      %v744 = vld [vmem:[#allocation2 + $0x99] sm:$0xff]
      %v745 = vld [vmem:[#allocation2 + $0xa9] sm:$0xff]
      %v746 = vld [vmem:[#allocation2 + $0xb1] sm:$0xff]
      %v747 = vld [vmem:[#allocation2 + $0xc1] sm:$0xff]
      %v748 = vld [vmem:[#allocation2 + $0xc9] sm:$0xff]
      %v749 = vld [vmem:[#allocation2 + $0xd9] sm:$0xff]
      %v750 = vld [vmem:[#allocation2 + $0xe1] sm:$0xff]
      %v751 = vld [vmem:[#allocation2 + $0xf1] sm:$0xff]
      %v752 = vld [vmem:[#allocation2 + $0xf9] sm:$0xff]
      %v753 = vld [vmem:[#allocation2 + $0x109] sm:$0xff]
      %v754 = vld [vmem:[#allocation2 + $0x111] sm:$0xff]
      %v755 = vld [vmem:[#allocation2 + $0x121] sm:$0xff]
      %v756 = vld [vmem:[#allocation2 + $0x129] sm:$0xff]
      %v757 = vld [vmem:[#allocation2 + $0x139] sm:$0xff]
      %v758 = vld [vmem:[#allocation2 + $0x141] sm:$0xff]
      %v759 = vld [vmem:[#allocation2 + $0x151] sm:$0xff]
      %v760 = vld [vmem:[#allocation2 + $0x159] sm:$0xff]
      %v761 = vld [vmem:[#allocation2 + $0x169] sm:$0xff]
      %v762 = vld [vmem:[#allocation2 + $0x171] sm:$0xff]
      %v763 = vpack.c.bf16 %v732, %v731
      %v764 = vpack.c.bf16 %v734, %v733
      %v765 = vpack.c.bf16 %v736, %v735
      %v766 = vpack.c.bf16 %v738, %v737
      %v767 = vpack.c.bf16 %v740, %v739
      %v768 = vpack.c.bf16 %v742, %v741
      %v769 = vpack.c.bf16 %v744, %v743
      %v770 = vpack.c.bf16 %v746, %v745
      %v771 = vpack.c.bf16 %v748, %v747
      %v772 = vpack.c.bf16 %v750, %v749
      %v773 = vpack.c.bf16 %v752, %v751
      %v774 = vpack.c.bf16 %v754, %v753
      %v775 = vpack.c.bf16 %v756, %v755
      %v776 = vpack.c.bf16 %v758, %v757
      %v777 = vpack.c.bf16 %v760, %v759
      %v778 = vpack.c.bf16 %v762, %v761
      %795 = vrot.lane.b32.xlu0 %v763, 4
      %v796 = vpop.permute.xlu0 %795
      %797 = vrot.lane.b32.xlu0 %v764, 4
      %v798 = vpop.permute.xlu0 %797
      %799 = vrot.lane.b32.xlu0 %v765, 4
      %v800 = vpop.permute.xlu0 %799
      %801 = vrot.lane.b32.xlu0 %v766, 4
      %v802 = vpop.permute.xlu0 %801
      %803 = vrot.lane.b32.xlu0 %v767, 4
      %v804 = vpop.permute.xlu0 %803
      %805 = vrot.lane.b32.xlu0 %v768, 4
      %v806 = vpop.permute.xlu0 %805
      %807 = vrot.lane.b32.xlu0 %v769, 4
      %v808 = vpop.permute.xlu0 %807
      %809 = vrot.lane.b32.xlu0 %v770, 4
      %v810 = vpop.permute.xlu0 %809
      %811 = vrot.lane.b32.xlu0 %v771, 4
      %v812 = vpop.permute.xlu0 %811
      %813 = vrot.lane.b32.xlu0 %v772, 4
      %v814 = vpop.permute.xlu0 %813
      %815 = vrot.lane.b32.xlu0 %v773, 4
      %v816 = vpop.permute.xlu0 %815
      %817 = vrot.lane.b32.xlu0 %v774, 4
      %v818 = vpop.permute.xlu0 %817
      %819 = vrot.lane.b32.xlu0 %v775, 4
      %v820 = vpop.permute.xlu0 %819
      %821 = vrot.lane.b32.xlu0 %v776, 4
      %v822 = vpop.permute.xlu0 %821
      %823 = vrot.lane.b32.xlu0 %v777, 4
      %v824 = vpop.permute.xlu0 %823
      %825 = vrot.lane.b32.xlu0 %v778, 4
      %v826 = vpop.permute.xlu0 %825
      %vm843 = vcmask 64544
      %844 = vst.msk [vmem:[#allocation3] sm:$0xff] %vm843, %v796
      %845 = vst.msk [vmem:[#allocation3 + $0x8] sm:$0xff] %vm843, %v798
      %846 = vst.msk [vmem:[#allocation3 + $0x10] sm:$0xff] %vm843, %v800
      %847 = vst.msk [vmem:[#allocation3 + $0x18] sm:$0xff] %vm843, %v802
      %848 = vst.msk [vmem:[#allocation3 + $0x20] sm:$0xff] %vm843, %v804
      %849 = vst.msk [vmem:[#allocation3 + $0x28] sm:$0xff] %vm843, %v806
      %850 = vst.msk [vmem:[#allocation3 + $0x30] sm:$0xff] %vm843, %v808
      %851 = vst.msk [vmem:[#allocation3 + $0x38] sm:$0xff] %vm843, %v810
      %852 = vst.msk [vmem:[#allocation3 + $0x40] sm:$0xff] %vm843, %v812
      %853 = vst.msk [vmem:[#allocation3 + $0x48] sm:$0xff] %vm843, %v814
      %854 = vst.msk [vmem:[#allocation3 + $0x50] sm:$0xff] %vm843, %v816
      %855 = vst.msk [vmem:[#allocation3 + $0x58] sm:$0xff] %vm843, %v818
      %856 = vst.msk [vmem:[#allocation3 + $0x60] sm:$0xff] %vm843, %v820
      %857 = vst.msk [vmem:[#allocation3 + $0x68] sm:$0xff] %vm843, %v822
      %858 = vst.msk [vmem:[#allocation3 + $0x70] sm:$0xff] %vm843, %v824
      %859 = vst.msk [vmem:[#allocation3 + $0x78] sm:$0xff] %vm843, %v826
      %v860 = vld [vmem:[#allocation2 + $0x2] sm:$0xff]
      %v861 = vld [vmem:[#allocation2 + $0xa] sm:$0xff]
      %v862 = vld [vmem:[#allocation2 + $0x1a] sm:$0xff]
      %v863 = vld [vmem:[#allocation2 + $0x22] sm:$0xff]
      %v864 = vld [vmem:[#allocation2 + $0x32] sm:$0xff]
      %v865 = vld [vmem:[#allocation2 + $0x3a] sm:$0xff]
      %v866 = vld [vmem:[#allocation2 + $0x4a] sm:$0xff]
      %v867 = vld [vmem:[#allocation2 + $0x52] sm:$0xff]
      %v868 = vld [vmem:[#allocation2 + $0x62] sm:$0xff]
      %v869 = vld [vmem:[#allocation2 + $0x6a] sm:$0xff]
      %v870 = vld [vmem:[#allocation2 + $0x7a] sm:$0xff]
      %v871 = vld [vmem:[#allocation2 + $0x82] sm:$0xff]
      %v872 = vld [vmem:[#allocation2 + $0x92] sm:$0xff]
      %v873 = vld [vmem:[#allocation2 + $0x9a] sm:$0xff]
      %v874 = vld [vmem:[#allocation2 + $0xaa] sm:$0xff]
      %v875 = vld [vmem:[#allocation2 + $0xb2] sm:$0xff]
      %v876 = vld [vmem:[#allocation2 + $0xc2] sm:$0xff]
      %v877 = vld [vmem:[#allocation2 + $0xca] sm:$0xff]
      %v878 = vld [vmem:[#allocation2 + $0xda] sm:$0xff]
      %v879 = vld [vmem:[#allocation2 + $0xe2] sm:$0xff]
      %v880 = vld [vmem:[#allocation2 + $0xf2] sm:$0xff]
      %v881 = vld [vmem:[#allocation2 + $0xfa] sm:$0xff]
      %v882 = vld [vmem:[#allocation2 + $0x10a] sm:$0xff]
      %v883 = vld [vmem:[#allocation2 + $0x112] sm:$0xff]
      %v884 = vld [vmem:[#allocation2 + $0x122] sm:$0xff]
      %v885 = vld [vmem:[#allocation2 + $0x12a] sm:$0xff]
      %v886 = vld [vmem:[#allocation2 + $0x13a] sm:$0xff]
      %v887 = vld [vmem:[#allocation2 + $0x142] sm:$0xff]
      %v888 = vld [vmem:[#allocation2 + $0x152] sm:$0xff]
      %v889 = vld [vmem:[#allocation2 + $0x15a] sm:$0xff]
      %v890 = vld [vmem:[#allocation2 + $0x16a] sm:$0xff]
      %v891 = vld [vmem:[#allocation2 + $0x172] sm:$0xff]
      %v892 = vpack.c.bf16 %v861, %v860
      %v893 = vpack.c.bf16 %v863, %v862
      %v894 = vpack.c.bf16 %v865, %v864
      %v895 = vpack.c.bf16 %v867, %v866
      %v896 = vpack.c.bf16 %v869, %v868
      %v897 = vpack.c.bf16 %v871, %v870
      %v898 = vpack.c.bf16 %v873, %v872
      %v899 = vpack.c.bf16 %v875, %v874
      %v900 = vpack.c.bf16 %v877, %v876
      %v901 = vpack.c.bf16 %v879, %v878
      %v902 = vpack.c.bf16 %v881, %v880
      %v903 = vpack.c.bf16 %v883, %v882
      %v904 = vpack.c.bf16 %v885, %v884
      %v905 = vpack.c.bf16 %v887, %v886
      %v906 = vpack.c.bf16 %v889, %v888
      %v907 = vpack.c.bf16 %v891, %v890
      %924 = vrot.lane.b32.xlu0 %v892, 8
      %v925 = vpop.permute.xlu0 %924
      %926 = vrot.lane.b32.xlu0 %v893, 8
      %v927 = vpop.permute.xlu0 %926
      %928 = vrot.lane.b32.xlu0 %v894, 8
      %v929 = vpop.permute.xlu0 %928
      %930 = vrot.lane.b32.xlu0 %v895, 8
      %v931 = vpop.permute.xlu0 %930
      %932 = vrot.lane.b32.xlu0 %v896, 8
      %v933 = vpop.permute.xlu0 %932
      %934 = vrot.lane.b32.xlu0 %v897, 8
      %v935 = vpop.permute.xlu0 %934
      %936 = vrot.lane.b32.xlu0 %v898, 8
      %v937 = vpop.permute.xlu0 %936
      %938 = vrot.lane.b32.xlu0 %v899, 8
      %v939 = vpop.permute.xlu0 %938
      %940 = vrot.lane.b32.xlu0 %v900, 8
      %v941 = vpop.permute.xlu0 %940
      %942 = vrot.lane.b32.xlu0 %v901, 8
      %v943 = vpop.permute.xlu0 %942
      %944 = vrot.lane.b32.xlu0 %v902, 8
      %v945 = vpop.permute.xlu0 %944
      %946 = vrot.lane.b32.xlu0 %v903, 8
      %v947 = vpop.permute.xlu0 %946
      %948 = vrot.lane.b32.xlu0 %v904, 8
      %v949 = vpop.permute.xlu0 %948
      %950 = vrot.lane.b32.xlu0 %v905, 8
      %v951 = vpop.permute.xlu0 %950
      %952 = vrot.lane.b32.xlu0 %v906, 8
      %v953 = vpop.permute.xlu0 %952
      %954 = vrot.lane.b32.xlu0 %v907, 8
      %v955 = vpop.permute.xlu0 %954
      %vm972 = vcmask 97344
      %973 = vst.msk [vmem:[#allocation3] sm:$0xff] %vm972, %v925
      %974 = vst.msk [vmem:[#allocation3 + $0x8] sm:$0xff] %vm972, %v927
      %975 = vst.msk [vmem:[#allocation3 + $0x10] sm:$0xff] %vm972, %v929
      %976 = vst.msk [vmem:[#allocation3 + $0x18] sm:$0xff] %vm972, %v931
      %977 = vst.msk [vmem:[#allocation3 + $0x20] sm:$0xff] %vm972, %v933
      %978 = vst.msk [vmem:[#allocation3 + $0x28] sm:$0xff] %vm972, %v935
      %979 = vst.msk [vmem:[#allocation3 + $0x30] sm:$0xff] %vm972, %v937
      %980 = vst.msk [vmem:[#allocation3 + $0x38] sm:$0xff] %vm972, %v939
      %981 = vst.msk [vmem:[#allocation3 + $0x40] sm:$0xff] %vm972, %v941
      %982 = vst.msk [vmem:[#allocation3 + $0x48] sm:$0xff] %vm972, %v943
      %983 = vst.msk [vmem:[#allocation3 + $0x50] sm:$0xff] %vm972, %v945
      %984 = vst.msk [vmem:[#allocation3 + $0x58] sm:$0xff] %vm972, %v947
      %985 = vst.msk [vmem:[#allocation3 + $0x60] sm:$0xff] %vm972, %v949
      %986 = vst.msk [vmem:[#allocation3 + $0x68] sm:$0xff] %vm972, %v951
      %987 = vst.msk [vmem:[#allocation3 + $0x70] sm:$0xff] %vm972, %v953
      %988 = vst.msk [vmem:[#allocation3 + $0x78] sm:$0xff] %vm972, %v955
      %v989 = vld [vmem:[#allocation3] sm:$0xff]
      %v990 = vld [vmem:[#allocation3 + $0x8] sm:$0xff]
      %v991 = vld [vmem:[#allocation3 + $0x10] sm:$0xff]
      %v992 = vld [vmem:[#allocation3 + $0x18] sm:$0xff]
      %v993 = vld [vmem:[#allocation3 + $0x20] sm:$0xff]
      %v994 = vld [vmem:[#allocation3 + $0x28] sm:$0xff]
      %v995 = vld [vmem:[#allocation3 + $0x30] sm:$0xff]
      %v996 = vld [vmem:[#allocation3 + $0x38] sm:$0xff]
      %v997 = vld [vmem:[#allocation3 + $0x40] sm:$0xff]
      %v998 = vld [vmem:[#allocation3 + $0x48] sm:$0xff]
      %v999 = vld [vmem:[#allocation3 + $0x50] sm:$0xff]
      %v1000 = vld [vmem:[#allocation3 + $0x58] sm:$0xff]
      %v1001 = vld [vmem:[#allocation3 + $0x60] sm:$0xff]
      %v1002 = vld [vmem:[#allocation3 + $0x68] sm:$0xff]
      %v1003 = vld [vmem:[#allocation3 + $0x70] sm:$0xff]
      %v1004 = vld [vmem:[#allocation3 + $0x78] sm:$0xff]
      %v1005 = vld [vmem:[%s3] sm:$0xf]
      %v1006 = vld [vmem:[%s3 + $0x4] sm:$0x3]
      %v1007 = vld [vmem:[%s601] sm:$0xff]
      %v1008 = vld [vmem:[%s601 + $0x8] sm:$0xff]
      %v1009 = vld [vmem:[%s601 + $0x18] sm:$0xff]
      %v1010 = vld [vmem:[%s601 + $0x20] sm:$0xff]
      %v1011 = vld [vmem:[%s601 + $0x30] sm:$0xff]
      %v1012 = vld [vmem:[%s601 + $0x38] sm:$0xff]
      %v1013 = vld [vmem:[%s601 + $0x48] sm:$0xff]
      %v1014 = vld [vmem:[%s601 + $0x50] sm:$0xff]
      %v1015 = vld [vmem:[%s601 + $0x60] sm:$0xff]
      %v1016 = vld [vmem:[%s601 + $0x68] sm:$0xff]
      %v1017 = vld [vmem:[%s601 + $0x78] sm:$0xff]
      %v1018 = vld [vmem:[%s601 + $0x80] sm:$0xff]
      %v1019 = vld [vmem:[%s601 + $0x90] sm:$0xff]
      %v1020 = vld [vmem:[%s601 + $0x98] sm:$0xff]
      %v1021 = vld [vmem:[%s601 + $0xa8] sm:$0xff]
      %v1022 = vld [vmem:[%s601 + $0xb0] sm:$0xff]
      %v1023 = vld [vmem:[%s601 + $0xc0] sm:$0xff]
      %v1024 = vld [vmem:[%s601 + $0xc8] sm:$0xff]
      %v1025 = vld [vmem:[%s601 + $0xd8] sm:$0xff]
      %v1026 = vld [vmem:[%s601 + $0xe0] sm:$0xff]
      %v1027 = vld [vmem:[%s601 + $0xf0] sm:$0xff]
      %v1028 = vld [vmem:[%s601 + $0xf8] sm:$0xff]
      %v1029 = vld [vmem:[%s601 + $0x108] sm:$0xff]
      %v1030 = vld [vmem:[%s601 + $0x110] sm:$0xff]
      %v1031 = vld [vmem:[%s601 + $0x120] sm:$0xff]
      %v1032 = vld [vmem:[%s601 + $0x128] sm:$0xff]
      %v1033 = vld [vmem:[%s601 + $0x138] sm:$0xff]
      %v1034 = vld [vmem:[%s601 + $0x140] sm:$0xff]
      %v1035 = vld [vmem:[%s601 + $0x150] sm:$0xff]
      %v1036 = vld [vmem:[%s601 + $0x158] sm:$0xff]
      %v1037 = vld [vmem:[%s601 + $0x168] sm:$0xff]
      %v1038 = vld [vmem:[%s601 + $0x170] sm:$0xff]
      %v1039 = vpack.c.bf16 %v1008, %v1007
      %v1040 = vpack.c.bf16 %v1010, %v1009
      %v1041 = vpack.c.bf16 %v1012, %v1011
      %v1042 = vpack.c.bf16 %v1014, %v1013
      %v1043 = vpack.c.bf16 %v1016, %v1015
      %v1044 = vpack.c.bf16 %v1018, %v1017
      %v1045 = vpack.c.bf16 %v1020, %v1019
      %v1046 = vpack.c.bf16 %v1022, %v1021
      %v1047 = vpack.c.bf16 %v1024, %v1023
      %v1048 = vpack.c.bf16 %v1026, %v1025
      %v1049 = vpack.c.bf16 %v1028, %v1027
      %v1050 = vpack.c.bf16 %v1030, %v1029
      %v1051 = vpack.c.bf16 %v1032, %v1031
      %v1052 = vpack.c.bf16 %v1034, %v1033
      %v1053 = vpack.c.bf16 %v1036, %v1035
      %v1054 = vpack.c.bf16 %v1038, %v1037
      %1055 = vst.msk [vmem:[#allocation3] sm:$0xff] %vm347, %v1039
      %1056 = vst.msk [vmem:[#allocation3 + $0x8] sm:$0xff] %vm347, %v1040
      %1057 = vst.msk [vmem:[#allocation3 + $0x10] sm:$0xff] %vm347, %v1041
      %1058 = vst.msk [vmem:[#allocation3 + $0x18] sm:$0xff] %vm347, %v1042
      %1059 = vst.msk [vmem:[#allocation3 + $0x20] sm:$0xff] %vm347, %v1043
      %1060 = vst.msk [vmem:[#allocation3 + $0x28] sm:$0xff] %vm347, %v1044
      %1061 = vst.msk [vmem:[#allocation3 + $0x30] sm:$0xff] %vm347, %v1045
      %1062 = vst.msk [vmem:[#allocation3 + $0x38] sm:$0xff] %vm347, %v1046
      %1063 = vst.msk [vmem:[#allocation3 + $0x40] sm:$0xff] %vm347, %v1047
      %1064 = vst.msk [vmem:[#allocation3 + $0x48] sm:$0xff] %vm347, %v1048
      %1065 = vst.msk [vmem:[#allocation3 + $0x50] sm:$0xff] %vm347, %v1049
      %1066 = vst.msk [vmem:[#allocation3 + $0x58] sm:$0xff] %vm347, %v1050
      %1067 = vst.msk [vmem:[#allocation3 + $0x60] sm:$0xff] %vm347, %v1051
      %1068 = vst.msk [vmem:[#allocation3 + $0x68] sm:$0xff] %vm347, %v1052
      %1069 = vst.msk [vmem:[#allocation3 + $0x70] sm:$0xff] %vm347, %v1053
      %1070 = vst.msk [vmem:[#allocation3 + $0x78] sm:$0xff] %vm347, %v1054
      %v1071 = vld [vmem:[%s601 + $0x1] sm:$0xff]
      %v1072 = vld [vmem:[%s601 + $0x9] sm:$0xff]
      %v1073 = vld [vmem:[%s601 + $0x19] sm:$0xff]
      %v1074 = vld [vmem:[%s601 + $0x21] sm:$0xff]
      %v1075 = vld [vmem:[%s601 + $0x31] sm:$0xff]
      %v1076 = vld [vmem:[%s601 + $0x39] sm:$0xff]
      %v1077 = vld [vmem:[%s601 + $0x49] sm:$0xff]
      %v1078 = vld [vmem:[%s601 + $0x51] sm:$0xff]
      %v1079 = vld [vmem:[%s601 + $0x61] sm:$0xff]
      %v1080 = vld [vmem:[%s601 + $0x69] sm:$0xff]
      %v1081 = vld [vmem:[%s601 + $0x79] sm:$0xff]
      %v1082 = vld [vmem:[%s601 + $0x81] sm:$0xff]
      %v1083 = vld [vmem:[%s601 + $0x91] sm:$0xff]
      %v1084 = vld [vmem:[%s601 + $0x99] sm:$0xff]
      %v1085 = vld [vmem:[%s601 + $0xa9] sm:$0xff]
      %v1086 = vld [vmem:[%s601 + $0xb1] sm:$0xff]
      %v1087 = vld [vmem:[%s601 + $0xc1] sm:$0xff]
      %v1088 = vld [vmem:[%s601 + $0xc9] sm:$0xff]
      %v1089 = vld [vmem:[%s601 + $0xd9] sm:$0xff]
      %v1090 = vld [vmem:[%s601 + $0xe1] sm:$0xff]
      %v1091 = vld [vmem:[%s601 + $0xf1] sm:$0xff]
      %v1092 = vld [vmem:[%s601 + $0xf9] sm:$0xff]
      %v1093 = vld [vmem:[%s601 + $0x109] sm:$0xff]
      %v1094 = vld [vmem:[%s601 + $0x111] sm:$0xff]
      %v1095 = vld [vmem:[%s601 + $0x121] sm:$0xff]
      %v1096 = vld [vmem:[%s601 + $0x129] sm:$0xff]
      %v1097 = vld [vmem:[%s601 + $0x139] sm:$0xff]
      %v1098 = vld [vmem:[%s601 + $0x141] sm:$0xff]
      %v1099 = vld [vmem:[%s601 + $0x151] sm:$0xff]
      %v1100 = vld [vmem:[%s601 + $0x159] sm:$0xff]
      %v1101 = vld [vmem:[%s601 + $0x169] sm:$0xff]
      %v1102 = vld [vmem:[%s601 + $0x171] sm:$0xff]
      %v1103 = vpack.c.bf16 %v1072, %v1071
      %v1104 = vpack.c.bf16 %v1074, %v1073
      %v1105 = vpack.c.bf16 %v1076, %v1075
      %v1106 = vpack.c.bf16 %v1078, %v1077
      %v1107 = vpack.c.bf16 %v1080, %v1079
      %v1108 = vpack.c.bf16 %v1082, %v1081
      %v1109 = vpack.c.bf16 %v1084, %v1083
      %v1110 = vpack.c.bf16 %v1086, %v1085
      %v1111 = vpack.c.bf16 %v1088, %v1087
      %v1112 = vpack.c.bf16 %v1090, %v1089
      %v1113 = vpack.c.bf16 %v1092, %v1091
      %v1114 = vpack.c.bf16 %v1094, %v1093
      %v1115 = vpack.c.bf16 %v1096, %v1095
      %v1116 = vpack.c.bf16 %v1098, %v1097
      %v1117 = vpack.c.bf16 %v1100, %v1099
      %v1118 = vpack.c.bf16 %v1102, %v1101
      %1135 = vrot.lane.b32.xlu0 %v1103, 4
      %v1136 = vpop.permute.xlu0 %1135
      %1137 = vrot.lane.b32.xlu0 %v1104, 4
      %v1138 = vpop.permute.xlu0 %1137
      %1139 = vrot.lane.b32.xlu0 %v1105, 4
      %v1140 = vpop.permute.xlu0 %1139
      %1141 = vrot.lane.b32.xlu0 %v1106, 4
      %v1142 = vpop.permute.xlu0 %1141
      %1143 = vrot.lane.b32.xlu0 %v1107, 4
      %v1144 = vpop.permute.xlu0 %1143
      %1145 = vrot.lane.b32.xlu0 %v1108, 4
      %v1146 = vpop.permute.xlu0 %1145
      %1147 = vrot.lane.b32.xlu0 %v1109, 4
      %v1148 = vpop.permute.xlu0 %1147
      %1149 = vrot.lane.b32.xlu0 %v1110, 4
      %v1150 = vpop.permute.xlu0 %1149
      %1151 = vrot.lane.b32.xlu0 %v1111, 4
      %v1152 = vpop.permute.xlu0 %1151
      %1153 = vrot.lane.b32.xlu0 %v1112, 4
      %v1154 = vpop.permute.xlu0 %1153
      %1155 = vrot.lane.b32.xlu0 %v1113, 4
      %v1156 = vpop.permute.xlu0 %1155
      %1157 = vrot.lane.b32.xlu0 %v1114, 4
      %v1158 = vpop.permute.xlu0 %1157
      %1159 = vrot.lane.b32.xlu0 %v1115, 4
      %v1160 = vpop.permute.xlu0 %1159
      %1161 = vrot.lane.b32.xlu0 %v1116, 4
      %v1162 = vpop.permute.xlu0 %1161
      %1163 = vrot.lane.b32.xlu0 %v1117, 4
      %v1164 = vpop.permute.xlu0 %1163
      %1165 = vrot.lane.b32.xlu0 %v1118, 4
      %v1166 = vpop.permute.xlu0 %1165
      %1183 = vst.msk [vmem:[#allocation3] sm:$0xff] %vm843, %v1136
      %1184 = vst.msk [vmem:[#allocation3 + $0x8] sm:$0xff] %vm843, %v1138
      %1185 = vst.msk [vmem:[#allocation3 + $0x10] sm:$0xff] %vm843, %v1140
      %1186 = vst.msk [vmem:[#allocation3 + $0x18] sm:$0xff] %vm843, %v1142
      %1187 = vst.msk [vmem:[#allocation3 + $0x20] sm:$0xff] %vm843, %v1144
      %1188 = vst.msk [vmem:[#allocation3 + $0x28] sm:$0xff] %vm843, %v1146
      %1189 = vst.msk [vmem:[#allocation3 + $0x30] sm:$0xff] %vm843, %v1148
      %1190 = vst.msk [vmem:[#allocation3 + $0x38] sm:$0xff] %vm843, %v1150
      %1191 = vst.msk [vmem:[#allocation3 + $0x40] sm:$0xff] %vm843, %v1152
      %1192 = vst.msk [vmem:[#allocation3 + $0x48] sm:$0xff] %vm843, %v1154
      %1193 = vst.msk [vmem:[#allocation3 + $0x50] sm:$0xff] %vm843, %v1156
      %1194 = vst.msk [vmem:[#allocation3 + $0x58] sm:$0xff] %vm843, %v1158
      %1195 = vst.msk [vmem:[#allocation3 + $0x60] sm:$0xff] %vm843, %v1160
      %1196 = vst.msk [vmem:[#allocation3 + $0x68] sm:$0xff] %vm843, %v1162
      %1197 = vst.msk [vmem:[#allocation3 + $0x70] sm:$0xff] %vm843, %v1164
      %1198 = vst.msk [vmem:[#allocation3 + $0x78] sm:$0xff] %vm843, %v1166
      %v1199 = vld [vmem:[%s601 + $0x2] sm:$0xff]
      %v1200 = vld [vmem:[%s601 + $0xa] sm:$0xff]
      %v1201 = vld [vmem:[%s601 + $0x1a] sm:$0xff]
      %v1202 = vld [vmem:[%s601 + $0x22] sm:$0xff]
      %v1203 = vld [vmem:[%s601 + $0x32] sm:$0xff]
      %v1204 = vld [vmem:[%s601 + $0x3a] sm:$0xff]
      %v1205 = vld [vmem:[%s601 + $0x4a] sm:$0xff]
      %v1206 = vld [vmem:[%s601 + $0x52] sm:$0xff]
      %v1207 = vld [vmem:[%s601 + $0x62] sm:$0xff]
      %v1208 = vld [vmem:[%s601 + $0x6a] sm:$0xff]
      %v1209 = vld [vmem:[%s601 + $0x7a] sm:$0xff]
      %v1210 = vld [vmem:[%s601 + $0x82] sm:$0xff]
      %v1211 = vld [vmem:[%s601 + $0x92] sm:$0xff]
      %v1212 = vld [vmem:[%s601 + $0x9a] sm:$0xff]
      %v1213 = vld [vmem:[%s601 + $0xaa] sm:$0xff]
      %v1214 = vld [vmem:[%s601 + $0xb2] sm:$0xff]
      %v1215 = vld [vmem:[%s601 + $0xc2] sm:$0xff]
      %v1216 = vld [vmem:[%s601 + $0xca] sm:$0xff]
      %v1217 = vld [vmem:[%s601 + $0xda] sm:$0xff]
      %v1218 = vld [vmem:[%s601 + $0xe2] sm:$0xff]
      %v1219 = vld [vmem:[%s601 + $0xf2] sm:$0xff]
      %v1220 = vld [vmem:[%s601 + $0xfa] sm:$0xff]
      %v1221 = vld [vmem:[%s601 + $0x10a] sm:$0xff]
      %v1222 = vld [vmem:[%s601 + $0x112] sm:$0xff]
      %v1223 = vld [vmem:[%s601 + $0x122] sm:$0xff]
      %v1224 = vld [vmem:[%s601 + $0x12a] sm:$0xff]
      %v1225 = vld [vmem:[%s601 + $0x13a] sm:$0xff]
      %v1226 = vld [vmem:[%s601 + $0x142] sm:$0xff]
      %v1227 = vld [vmem:[%s601 + $0x152] sm:$0xff]
      %v1228 = vld [vmem:[%s601 + $0x15a] sm:$0xff]
      %v1229 = vld [vmem:[%s601 + $0x16a] sm:$0xff]
      %v1230 = vld [vmem:[%s601 + $0x172] sm:$0xff]
      %v1231 = vpack.c.bf16 %v1200, %v1199
      %v1232 = vpack.c.bf16 %v1202, %v1201
      %v1233 = vpack.c.bf16 %v1204, %v1203
      %v1234 = vpack.c.bf16 %v1206, %v1205
      %v1235 = vpack.c.bf16 %v1208, %v1207
      %v1236 = vpack.c.bf16 %v1210, %v1209
      %v1237 = vpack.c.bf16 %v1212, %v1211
      %v1238 = vpack.c.bf16 %v1214, %v1213
      %v1239 = vpack.c.bf16 %v1216, %v1215
      %v1240 = vpack.c.bf16 %v1218, %v1217
      %v1241 = vpack.c.bf16 %v1220, %v1219
      %v1242 = vpack.c.bf16 %v1222, %v1221
      %v1243 = vpack.c.bf16 %v1224, %v1223
      %v1244 = vpack.c.bf16 %v1226, %v1225
      %v1245 = vpack.c.bf16 %v1228, %v1227
      %v1246 = vpack.c.bf16 %v1230, %v1229
      %1263 = vrot.lane.b32.xlu0 %v1231, 8
      %v1264 = vpop.permute.xlu0 %1263
      %1265 = vrot.lane.b32.xlu0 %v1232, 8
      %v1266 = vpop.permute.xlu0 %1265
      %1267 = vrot.lane.b32.xlu0 %v1233, 8
      %v1268 = vpop.permute.xlu0 %1267
      %1269 = vrot.lane.b32.xlu0 %v1234, 8
      %v1270 = vpop.permute.xlu0 %1269
      %1271 = vrot.lane.b32.xlu0 %v1235, 8
      %v1272 = vpop.permute.xlu0 %1271
      %1273 = vrot.lane.b32.xlu0 %v1236, 8
      %v1274 = vpop.permute.xlu0 %1273
      %1275 = vrot.lane.b32.xlu0 %v1237, 8
      %v1276 = vpop.permute.xlu0 %1275
      %1277 = vrot.lane.b32.xlu0 %v1238, 8
      %v1278 = vpop.permute.xlu0 %1277
      %1279 = vrot.lane.b32.xlu0 %v1239, 8
      %v1280 = vpop.permute.xlu0 %1279
      %1281 = vrot.lane.b32.xlu0 %v1240, 8
      %v1282 = vpop.permute.xlu0 %1281
      %1283 = vrot.lane.b32.xlu0 %v1241, 8
      %v1284 = vpop.permute.xlu0 %1283
      %1285 = vrot.lane.b32.xlu0 %v1242, 8
      %v1286 = vpop.permute.xlu0 %1285
      %1287 = vrot.lane.b32.xlu0 %v1243, 8
      %v1288 = vpop.permute.xlu0 %1287
      %1289 = vrot.lane.b32.xlu0 %v1244, 8
      %v1290 = vpop.permute.xlu0 %1289
      %1291 = vrot.lane.b32.xlu0 %v1245, 8
      %v1292 = vpop.permute.xlu0 %1291
      %1293 = vrot.lane.b32.xlu0 %v1246, 8
      %v1294 = vpop.permute.xlu0 %1293
      %1311 = vst.msk [vmem:[#allocation3] sm:$0xff] %vm972, %v1264
      %1312 = vst.msk [vmem:[#allocation3 + $0x8] sm:$0xff] %vm972, %v1266
      %1313 = vst.msk [vmem:[#allocation3 + $0x10] sm:$0xff] %vm972, %v1268
      %1314 = vst.msk [vmem:[#allocation3 + $0x18] sm:$0xff] %vm972, %v1270
      %1315 = vst.msk [vmem:[#allocation3 + $0x20] sm:$0xff] %vm972, %v1272
      %1316 = vst.msk [vmem:[#allocation3 + $0x28] sm:$0xff] %vm972, %v1274
      %1317 = vst.msk [vmem:[#allocation3 + $0x30] sm:$0xff] %vm972, %v1276
      %1318 = vst.msk [vmem:[#allocation3 + $0x38] sm:$0xff] %vm972, %v1278
      %1319 = vst.msk [vmem:[#allocation3 + $0x40] sm:$0xff] %vm972, %v1280
      %1320 = vst.msk [vmem:[#allocation3 + $0x48] sm:$0xff] %vm972, %v1282
      %1321 = vst.msk [vmem:[#allocation3 + $0x50] sm:$0xff] %vm972, %v1284
      %1322 = vst.msk [vmem:[#allocation3 + $0x58] sm:$0xff] %vm972, %v1286
      %1323 = vst.msk [vmem:[#allocation3 + $0x60] sm:$0xff] %vm972, %v1288
      %1324 = vst.msk [vmem:[#allocation3 + $0x68] sm:$0xff] %vm972, %v1290
      %1325 = vst.msk [vmem:[#allocation3 + $0x70] sm:$0xff] %vm972, %v1292
      %1326 = vst.msk [vmem:[#allocation3 + $0x78] sm:$0xff] %vm972, %v1294
      %v1327 = vld [vmem:[#allocation3] sm:$0xff]
      %v1328 = vld [vmem:[#allocation3 + $0x8] sm:$0xff]
      %v1329 = vld [vmem:[#allocation3 + $0x10] sm:$0xff]
      %v1330 = vld [vmem:[#allocation3 + $0x18] sm:$0xff]
      %v1331 = vld [vmem:[#allocation3 + $0x20] sm:$0xff]
      %v1332 = vld [vmem:[#allocation3 + $0x28] sm:$0xff]
      %v1333 = vld [vmem:[#allocation3 + $0x30] sm:$0xff]
      %v1334 = vld [vmem:[#allocation3 + $0x38] sm:$0xff]
      %v1335 = vld [vmem:[#allocation3 + $0x40] sm:$0xff]
      %v1336 = vld [vmem:[#allocation3 + $0x48] sm:$0xff]
      %v1337 = vld [vmem:[#allocation3 + $0x50] sm:$0xff]
      %v1338 = vld [vmem:[#allocation3 + $0x58] sm:$0xff]
      %v1339 = vld [vmem:[#allocation3 + $0x60] sm:$0xff]
      %v1340 = vld [vmem:[#allocation3 + $0x68] sm:$0xff]
      %v1341 = vld [vmem:[#allocation3 + $0x70] sm:$0xff]
      %v1342 = vld [vmem:[#allocation3 + $0x78] sm:$0xff]
      %s1343 = scalar_lea.vmem %s3, 8
      %v1344 = vld [vmem:[%s1343] sm:$0xf]
      %v1345 = vld [vmem:[%s1343 + $0x4] sm:$0x3]
      %v1348 = vunpack.c.l.b16 %v1344
      %v1349 = vunpack.c.l.b16 %v1345
      %v1350 = vpack.c.b16 %v1349, %v1348
      %vm1351 = vcmask 97280
      %v1353 = vsel %vm1351, %v1327, 0
      %v1356 = vsel %vm1351, %v1328, 0
      %v1359 = vsel %vm1351, %v1329, 0
      %v1362 = vsel %vm1351, %v1330, 0
      %v1365 = vsel %vm1351, %v1331, 0
      %v1368 = vsel %vm1351, %v1332, 0
      %v1371 = vsel %vm1351, %v1333, 0
      %v1374 = vsel %vm1351, %v1334, 0
      %v1377 = vsel %vm1351, %v1335, 0
      %v1380 = vsel %vm1351, %v1336, 0
      %v1383 = vsel %vm1351, %v1337, 0
      %v1386 = vsel %vm1351, %v1338, 0
      %v1389 = vsel %vm1351, %v1339, 0
      %v1392 = vsel %vm1351, %v1340, 0
      %v1395 = vsel %vm1351, %v1341, 0
      %v1398 = vsel %vm1351, %v1342, 0
      %vm1400 = vcmask 1045504
      %v1402 = vsel %vm1400, %v1350, 0
      %1404 = vmatprep.subr.bf16.mxu0 0
      %1405 = vmatpush1.bf16.msra.mxu0 %v1402
      %1406 = vmatprep.subr.bf16.mxu0 0
      %1407 = vmatpush1.bf16.msra.mxu0 0
      %1408 = vmatprep.subr.bf16.mxu0 0
      %1409 = vmatpush1.bf16.msra.mxu0 0
      %1410 = vmatprep.subr.bf16.mxu0 0
      %1411 = vmatpush1.bf16.msra.mxu0 0
      %1412 = vmatprep.subr.bf16.mxu0 0
      %1413 = vmatpush1.bf16.msra.mxu0 0
      %1414 = vmatprep.subr.bf16.mxu0 0
      %1415 = vmatpush1.bf16.msra.mxu0 0
      %1416 = vmatprep.subr.bf16.mxu0 0
      %1417 = vmatpush1.bf16.msra.mxu0 0
      %1418 = vmatprep.subr.bf16.mxu0 0
      %1419 = vmatpush1.bf16.msra.mxu0 0
      %1420 = vmatprep.subr.bf16.mxu0 0
      %1421 = vmatpush1.bf16.msra.mxu0 0
      %1422 = vmatprep.subr.bf16.mxu0 0
      %1423 = vmatpush1.bf16.msra.mxu0 0
      %1424 = vmatprep.subr.bf16.mxu0 0
      %1425 = vmatpush1.bf16.msra.mxu0 0
      %1426 = vmatprep.subr.bf16.mxu0 0
      %1427 = vmatpush1.bf16.msra.mxu0 0
      %1428 = vmatprep.subr.bf16.mxu0 0
      %1429 = vmatpush1.bf16.msra.mxu0 0
      %1430 = vmatprep.subr.bf16.mxu0 0
      %1431 = vmatpush1.bf16.msra.mxu0 0
      %1432 = vmatprep.subr.bf16.mxu0 0
      %1433 = vmatpush1.bf16.msra.mxu0 0
      %1434 = vmatprep.subr.bf16.mxu0 0
      %1435 = vmatpush1.bf16.msra.mxu0 0
      %1436 = vmatprep.mubr.bf16.mxu0 0
      %1437 = vmatmul.mubr.bf16.gmra.mrb[0].mxu0 %v1353
      %v1438 = vpop.f32.mrb[0].mxu0
      %v1439 = vadd.f32 0.0, %v1438
      %v1440 = vpop.f32.mrb[0].mxu0
      %v1441 = vpop.f32.mrb[0].mxu0
      %v1442 = vadd.f32 0.0, %v1441
      %v1443 = vpop.f32.mrb[0].mxu0
      %1444 = vmatprep.mubr.bf16.mxu0 0
      %1445 = vmatmul.mubr.bf16.gmra.mrb[0].mxu0 %v1356
      %v1446 = vpop.f32.mrb[0].mxu0
      %v1447 = vadd.f32 0.0, %v1446
      %v1448 = vpop.f32.mrb[0].mxu0
      %v1449 = vpop.f32.mrb[0].mxu0
      %v1450 = vadd.f32 0.0, %v1449
      %v1451 = vpop.f32.mrb[0].mxu0
      %1452 = vmatprep.mubr.bf16.mxu0 0
      %1453 = vmatmul.mubr.bf16.gmra.mrb[0].mxu0 %v1359
      %v1454 = vpop.f32.mrb[0].mxu0
      %v1455 = vadd.f32 0.0, %v1454
      %v1456 = vpop.f32.mrb[0].mxu0
      %v1457 = vpop.f32.mrb[0].mxu0
      %v1458 = vadd.f32 0.0, %v1457
      %v1459 = vpop.f32.mrb[0].mxu0
      %1460 = vmatprep.mubr.bf16.mxu0 0
      %1461 = vmatmul.mubr.bf16.gmra.mrb[0].mxu0 %v1362
      %v1462 = vpop.f32.mrb[0].mxu0
      %v1463 = vadd.f32 0.0, %v1462
      %v1464 = vpop.f32.mrb[0].mxu0
      %v1465 = vpop.f32.mrb[0].mxu0
      %v1466 = vadd.f32 0.0, %v1465
      %v1467 = vpop.f32.mrb[0].mxu0
      %1468 = vmatprep.mubr.bf16.mxu0 0
      %1469 = vmatmul.mubr.bf16.gmra.mrb[0].mxu0 %v1365
      %v1470 = vpop.f32.mrb[0].mxu0
      %v1471 = vadd.f32 0.0, %v1470
      %v1472 = vpop.f32.mrb[0].mxu0
      %v1473 = vpop.f32.mrb[0].mxu0
      %v1474 = vadd.f32 0.0, %v1473
      %v1475 = vpop.f32.mrb[0].mxu0
      %1476 = vmatprep.mubr.bf16.mxu0 0
      %1477 = vmatmul.mubr.bf16.gmra.mrb[0].mxu0 %v1368
      %v1478 = vpop.f32.mrb[0].mxu0
      %v1479 = vadd.f32 0.0, %v1478
      %v1480 = vpop.f32.mrb[0].mxu0
      %v1481 = vpop.f32.mrb[0].mxu0
      %v1482 = vadd.f32 0.0, %v1481
      %v1483 = vpop.f32.mrb[0].mxu0
      %1484 = vmatprep.mubr.bf16.mxu0 0
      %1485 = vmatmul.mubr.bf16.gmra.mrb[0].mxu0 %v1371
      %v1486 = vpop.f32.mrb[0].mxu0
      %v1487 = vadd.f32 0.0, %v1486
      %v1488 = vpop.f32.mrb[0].mxu0
      %v1489 = vpop.f32.mrb[0].mxu0
      %v1490 = vadd.f32 0.0, %v1489
      %v1491 = vpop.f32.mrb[0].mxu0
      %1492 = vmatprep.mubr.bf16.mxu0 0
      %1493 = vmatmul.mubr.bf16.gmra.mrb[0].mxu0 %v1374
      %v1494 = vpop.f32.mrb[0].mxu0
      %v1495 = vadd.f32 0.0, %v1494
      %v1496 = vpop.f32.mrb[0].mxu0
      %v1497 = vpop.f32.mrb[0].mxu0
      %v1498 = vadd.f32 0.0, %v1497
      %v1499 = vpop.f32.mrb[0].mxu0
      %1500 = vmatprep.mubr.bf16.mxu0 0
      %1501 = vmatmul.mubr.bf16.gmra.mrb[0].mxu0 %v1377
      %v1502 = vpop.f32.mrb[0].mxu0
      %v1503 = vadd.f32 0.0, %v1502
      %v1504 = vpop.f32.mrb[0].mxu0
      %v1505 = vpop.f32.mrb[0].mxu0
      %v1506 = vadd.f32 0.0, %v1505
      %v1507 = vpop.f32.mrb[0].mxu0
      %1508 = vmatprep.mubr.bf16.mxu0 0
      %1509 = vmatmul.mubr.bf16.gmra.mrb[0].mxu0 %v1380
      %v1510 = vpop.f32.mrb[0].mxu0
      %v1511 = vadd.f32 0.0, %v1510
      %v1512 = vpop.f32.mrb[0].mxu0
      %v1513 = vpop.f32.mrb[0].mxu0
      %v1514 = vadd.f32 0.0, %v1513
      %v1515 = vpop.f32.mrb[0].mxu0
      %1516 = vmatprep.mubr.bf16.mxu0 0
      %1517 = vmatmul.mubr.bf16.gmra.mrb[0].mxu0 %v1383
      %v1518 = vpop.f32.mrb[0].mxu0
      %v1519 = vadd.f32 0.0, %v1518
      %v1520 = vpop.f32.mrb[0].mxu0
      %v1521 = vpop.f32.mrb[0].mxu0
      %v1522 = vadd.f32 0.0, %v1521
      %v1523 = vpop.f32.mrb[0].mxu0
      %1524 = vmatprep.mubr.bf16.mxu0 0
      %1525 = vmatmul.mubr.bf16.gmra.mrb[0].mxu0 %v1386
      %v1526 = vpop.f32.mrb[0].mxu0
      %v1527 = vadd.f32 0.0, %v1526
      %v1528 = vpop.f32.mrb[0].mxu0
      %v1529 = vpop.f32.mrb[0].mxu0
      %v1530 = vadd.f32 0.0, %v1529
      %v1531 = vpop.f32.mrb[0].mxu0
      %1532 = vmatprep.mubr.bf16.mxu0 0
      %1533 = vmatmul.mubr.bf16.gmra.mrb[0].mxu0 %v1389
      %v1534 = vpop.f32.mrb[0].mxu0
      %v1535 = vadd.f32 0.0, %v1534
      %v1536 = vpop.f32.mrb[0].mxu0
      %v1537 = vpop.f32.mrb[0].mxu0
      %v1538 = vadd.f32 0.0, %v1537
      %v1539 = vpop.f32.mrb[0].mxu0
      %1540 = vmatprep.mubr.bf16.mxu0 0
      %1541 = vmatmul.mubr.bf16.gmra.mrb[0].mxu0 %v1392
      %v1542 = vpop.f32.mrb[0].mxu0
      %v1543 = vadd.f32 0.0, %v1542
      %v1544 = vpop.f32.mrb[0].mxu0
      %v1545 = vpop.f32.mrb[0].mxu0
      %v1546 = vadd.f32 0.0, %v1545
      %v1547 = vpop.f32.mrb[0].mxu0
      %1548 = vmatprep.mubr.bf16.mxu0 0
      %1549 = vmatmul.mubr.bf16.gmra.mrb[0].mxu0 %v1395
      %v1550 = vpop.f32.mrb[0].mxu0
      %v1551 = vadd.f32 0.0, %v1550
      %v1552 = vpop.f32.mrb[0].mxu0
      %v1553 = vpop.f32.mrb[0].mxu0
      %v1554 = vadd.f32 0.0, %v1553
      %v1555 = vpop.f32.mrb[0].mxu0
      %1556 = vmatprep.mubr.bf16.mxu0 0
      %1557 = vmatmul.mubr.bf16.gmra.mrb[0].mxu0 %v1398
      %v1558 = vpop.f32.mrb[0].mxu0
      %v1559 = vadd.f32 0.0, %v1558
      %v1560 = vpop.f32.mrb[0].mxu0
      %v1561 = vpop.f32.mrb[0].mxu0
      %v1562 = vadd.f32 0.0, %v1561
      %v1563 = vpop.f32.mrb[0].mxu0
      %1564 = vdwg.mxu0
      %v1567 = vunpack.c.l.b16 %v1005
      %v1568 = vunpack.c.l.b16 %v1006
      %v1569 = vpack.c.b16 %v1568, %v1567
      %v1571 = vsel %vm1351, %v989, 0
      %v1574 = vsel %vm1351, %v990, 0
      %v1577 = vsel %vm1351, %v991, 0
      %v1580 = vsel %vm1351, %v992, 0
      %v1583 = vsel %vm1351, %v993, 0
      %v1586 = vsel %vm1351, %v994, 0
      %v1589 = vsel %vm1351, %v995, 0
      %v1592 = vsel %vm1351, %v996, 0
      %v1595 = vsel %vm1351, %v997, 0
      %v1598 = vsel %vm1351, %v998, 0
      %v1601 = vsel %vm1351, %v999, 0
      %v1604 = vsel %vm1351, %v1000, 0
      %v1607 = vsel %vm1351, %v1001, 0
      %v1610 = vsel %vm1351, %v1002, 0
      %v1613 = vsel %vm1351, %v1003, 0
      %v1616 = vsel %vm1351, %v1004, 0
      %v1619 = vsel %vm1400, %v1569, 0
      %1621 = vmatprep.subr.bf16.mxu0 0
      %1622 = vmatpush1.bf16.msra.mxu0 %v1619
      %1623 = vmatprep.subr.bf16.mxu0 0
      %1624 = vmatpush1.bf16.msra.mxu0 0
      %1625 = vmatprep.subr.bf16.mxu0 0
      %1626 = vmatpush1.bf16.msra.mxu0 0
      %1627 = vmatprep.subr.bf16.mxu0 0
      %1628 = vmatpush1.bf16.msra.mxu0 0
      %1629 = vmatprep.subr.bf16.mxu0 0
      %1630 = vmatpush1.bf16.msra.mxu0 0
      %1631 = vmatprep.subr.bf16.mxu0 0
      %1632 = vmatpush1.bf16.msra.mxu0 0
      %1633 = vmatprep.subr.bf16.mxu0 0
      %1634 = vmatpush1.bf16.msra.mxu0 0
      %1635 = vmatprep.subr.bf16.mxu0 0
      %1636 = vmatpush1.bf16.msra.mxu0 0
      %1637 = vmatprep.subr.bf16.mxu0 0
      %1638 = vmatpush1.bf16.msra.mxu0 0
      %1639 = vmatprep.subr.bf16.mxu0 0
      %1640 = vmatpush1.bf16.msra.mxu0 0
      %1641 = vmatprep.subr.bf16.mxu0 0
      %1642 = vmatpush1.bf16.msra.mxu0 0
      %1643 = vmatprep.subr.bf16.mxu0 0
      %1644 = vmatpush1.bf16.msra.mxu0 0
      %1645 = vmatprep.subr.bf16.mxu0 0
      %1646 = vmatpush1.bf16.msra.mxu0 0
      %1647 = vmatprep.subr.bf16.mxu0 0
      %1648 = vmatpush1.bf16.msra.mxu0 0
      %1649 = vmatprep.subr.bf16.mxu0 0
      %1650 = vmatpush1.bf16.msra.mxu0 0
      %1651 = vmatprep.subr.bf16.mxu0 0
      %1652 = vmatpush1.bf16.msra.mxu0 0
      %1653 = vmatprep.mubr.bf16.mxu0 0
      %1654 = vmatmul.mubr.bf16.gmra.mrb[0].mxu0 %v1571
      %v1655 = vpop.f32.mrb[0].mxu0
      %v1656 = vadd.f32 %v1439, %v1655
      %v1657 = vpop.f32.mrb[0].mxu0
      %v1658 = vpop.f32.mrb[0].mxu0
      %v1659 = vadd.f32 %v1442, %v1658
      %v1660 = vpop.f32.mrb[0].mxu0
      %1661 = vmatprep.mubr.bf16.mxu0 0
      %1662 = vmatmul.mubr.bf16.gmra.mrb[0].mxu0 %v1574
      %v1663 = vpop.f32.mrb[0].mxu0
      %v1664 = vadd.f32 %v1447, %v1663
      %v1665 = vpop.f32.mrb[0].mxu0
      %v1666 = vpop.f32.mrb[0].mxu0
      %v1667 = vadd.f32 %v1450, %v1666
      %v1668 = vpop.f32.mrb[0].mxu0
      %1669 = vmatprep.mubr.bf16.mxu0 0
      %1670 = vmatmul.mubr.bf16.gmra.mrb[0].mxu0 %v1577
      %v1671 = vpop.f32.mrb[0].mxu0
      %v1672 = vadd.f32 %v1455, %v1671
      %v1673 = vpop.f32.mrb[0].mxu0
      %v1674 = vpop.f32.mrb[0].mxu0
      %v1675 = vadd.f32 %v1458, %v1674
      %v1676 = vpop.f32.mrb[0].mxu0
      %1677 = vmatprep.mubr.bf16.mxu0 0
      %1678 = vmatmul.mubr.bf16.gmra.mrb[0].mxu0 %v1580
      %v1679 = vpop.f32.mrb[0].mxu0
      %v1680 = vadd.f32 %v1463, %v1679
      %v1681 = vpop.f32.mrb[0].mxu0
      %v1682 = vpop.f32.mrb[0].mxu0
      %v1683 = vadd.f32 %v1466, %v1682
      %v1684 = vpop.f32.mrb[0].mxu0
      %1685 = vmatprep.mubr.bf16.mxu0 0
      %1686 = vmatmul.mubr.bf16.gmra.mrb[0].mxu0 %v1583
      %v1687 = vpop.f32.mrb[0].mxu0
      %v1688 = vadd.f32 %v1471, %v1687
      %v1689 = vpop.f32.mrb[0].mxu0
      %v1690 = vpop.f32.mrb[0].mxu0
      %v1691 = vadd.f32 %v1474, %v1690
      %v1692 = vpop.f32.mrb[0].mxu0
      %1693 = vmatprep.mubr.bf16.mxu0 0
      %1694 = vmatmul.mubr.bf16.gmra.mrb[0].mxu0 %v1586
      %v1695 = vpop.f32.mrb[0].mxu0
      %v1696 = vadd.f32 %v1479, %v1695
      %v1697 = vpop.f32.mrb[0].mxu0
      %v1698 = vpop.f32.mrb[0].mxu0
      %v1699 = vadd.f32 %v1482, %v1698
      %v1700 = vpop.f32.mrb[0].mxu0
      %1701 = vmatprep.mubr.bf16.mxu0 0
      %1702 = vmatmul.mubr.bf16.gmra.mrb[0].mxu0 %v1589
      %v1703 = vpop.f32.mrb[0].mxu0
      %v1704 = vadd.f32 %v1487, %v1703
      %v1705 = vpop.f32.mrb[0].mxu0
      %v1706 = vpop.f32.mrb[0].mxu0
      %v1707 = vadd.f32 %v1490, %v1706
      %v1708 = vpop.f32.mrb[0].mxu0
      %1709 = vmatprep.mubr.bf16.mxu0 0
      %1710 = vmatmul.mubr.bf16.gmra.mrb[0].mxu0 %v1592
      %v1711 = vpop.f32.mrb[0].mxu0
      %v1712 = vadd.f32 %v1495, %v1711
      %v1713 = vpop.f32.mrb[0].mxu0
      %v1714 = vpop.f32.mrb[0].mxu0
      %v1715 = vadd.f32 %v1498, %v1714
      %v1716 = vpop.f32.mrb[0].mxu0
      %1717 = vmatprep.mubr.bf16.mxu0 0
      %1718 = vmatmul.mubr.bf16.gmra.mrb[0].mxu0 %v1595
      %v1719 = vpop.f32.mrb[0].mxu0
      %v1720 = vadd.f32 %v1503, %v1719
      %v1721 = vpop.f32.mrb[0].mxu0
      %v1722 = vpop.f32.mrb[0].mxu0
      %v1723 = vadd.f32 %v1506, %v1722
      %v1724 = vpop.f32.mrb[0].mxu0
      %1725 = vmatprep.mubr.bf16.mxu0 0
      %1726 = vmatmul.mubr.bf16.gmra.mrb[0].mxu0 %v1598
      %v1727 = vpop.f32.mrb[0].mxu0
      %v1728 = vadd.f32 %v1511, %v1727
      %v1729 = vpop.f32.mrb[0].mxu0
      %v1730 = vpop.f32.mrb[0].mxu0
      %v1731 = vadd.f32 %v1514, %v1730
      %v1732 = vpop.f32.mrb[0].mxu0
      %1733 = vmatprep.mubr.bf16.mxu0 0
      %1734 = vmatmul.mubr.bf16.gmra.mrb[0].mxu0 %v1601
      %v1735 = vpop.f32.mrb[0].mxu0
      %v1736 = vadd.f32 %v1519, %v1735
      %v1737 = vpop.f32.mrb[0].mxu0
      %v1738 = vpop.f32.mrb[0].mxu0
      %v1739 = vadd.f32 %v1522, %v1738
      %v1740 = vpop.f32.mrb[0].mxu0
      %1741 = vmatprep.mubr.bf16.mxu0 0
      %1742 = vmatmul.mubr.bf16.gmra.mrb[0].mxu0 %v1604
      %v1743 = vpop.f32.mrb[0].mxu0
      %v1744 = vadd.f32 %v1527, %v1743
      %v1745 = vpop.f32.mrb[0].mxu0
      %v1746 = vpop.f32.mrb[0].mxu0
      %v1747 = vadd.f32 %v1530, %v1746
      %v1748 = vpop.f32.mrb[0].mxu0
      %1749 = vmatprep.mubr.bf16.mxu0 0
      %1750 = vmatmul.mubr.bf16.gmra.mrb[0].mxu0 %v1607
      %v1751 = vpop.f32.mrb[0].mxu0
      %v1752 = vadd.f32 %v1535, %v1751
      %v1753 = vpop.f32.mrb[0].mxu0
      %v1754 = vpop.f32.mrb[0].mxu0
      %v1755 = vadd.f32 %v1538, %v1754
      %v1756 = vpop.f32.mrb[0].mxu0
      %1757 = vmatprep.mubr.bf16.mxu0 0
      %1758 = vmatmul.mubr.bf16.gmra.mrb[0].mxu0 %v1610
      %v1759 = vpop.f32.mrb[0].mxu0
      %v1760 = vadd.f32 %v1543, %v1759
      %v1761 = vpop.f32.mrb[0].mxu0
      %v1762 = vpop.f32.mrb[0].mxu0
      %v1763 = vadd.f32 %v1546, %v1762
      %v1764 = vpop.f32.mrb[0].mxu0
      %1765 = vmatprep.mubr.bf16.mxu0 0
      %1766 = vmatmul.mubr.bf16.gmra.mrb[0].mxu0 %v1613
      %v1767 = vpop.f32.mrb[0].mxu0
      %v1768 = vadd.f32 %v1551, %v1767
      %v1769 = vpop.f32.mrb[0].mxu0
      %v1770 = vpop.f32.mrb[0].mxu0
      %v1771 = vadd.f32 %v1554, %v1770
      %v1772 = vpop.f32.mrb[0].mxu0
      %1773 = vmatprep.mubr.bf16.mxu0 0
      %1774 = vmatmul.mubr.bf16.gmra.mrb[0].mxu0 %v1616
      %v1775 = vpop.f32.mrb[0].mxu0
      %v1776 = vadd.f32 %v1559, %v1775
      %v1777 = vpop.f32.mrb[0].mxu0
      %v1778 = vpop.f32.mrb[0].mxu0
      %v1779 = vadd.f32 %v1562, %v1778
      %v1780 = vpop.f32.mrb[0].mxu0
      %1781 = vdwg.mxu0
      %s1782 = scalar_lea.vmem [#allocation2], 48
      %v1783 = vld [vmem:[%s1782] sm:$0xff]
      %v1784 = vld [vmem:[%s1782 + $0x8] sm:$0xff]
      %v1785 = vld [vmem:[%s1782 + $0x18] sm:$0xff]
      %v1786 = vld [vmem:[%s1782 + $0x20] sm:$0xff]
      %v1787 = vld [vmem:[%s1782 + $0x30] sm:$0xff]
      %v1788 = vld [vmem:[%s1782 + $0x38] sm:$0xff]
      %v1789 = vld [vmem:[%s1782 + $0x48] sm:$0xff]
      %v1790 = vld [vmem:[%s1782 + $0x50] sm:$0xff]
      %v1791 = vld [vmem:[%s1782 + $0x60] sm:$0xff]
      %v1792 = vld [vmem:[%s1782 + $0x68] sm:$0xff]
      %v1793 = vld [vmem:[%s1782 + $0x78] sm:$0xff]
      %v1794 = vld [vmem:[%s1782 + $0x80] sm:$0xff]
      %v1795 = vld [vmem:[%s1782 + $0x90] sm:$0xff]
      %v1796 = vld [vmem:[%s1782 + $0x98] sm:$0xff]
      %v1797 = vld [vmem:[%s1782 + $0xa8] sm:$0xff]
      %v1798 = vld [vmem:[%s1782 + $0xb0] sm:$0xff]
      %v1799 = vld [vmem:[%s1782 + $0xc0] sm:$0xff]
      %v1800 = vld [vmem:[%s1782 + $0xc8] sm:$0xff]
      %v1801 = vld [vmem:[%s1782 + $0xd8] sm:$0xff]
      %v1802 = vld [vmem:[%s1782 + $0xe0] sm:$0xff]
      %v1803 = vld [vmem:[%s1782 + $0xf0] sm:$0xff]
      %v1804 = vld [vmem:[%s1782 + $0xf8] sm:$0xff]
      %v1805 = vld [vmem:[%s1782 + $0x108] sm:$0xff]
      %v1806 = vld [vmem:[%s1782 + $0x110] sm:$0xff]
      %v1807 = vld [vmem:[%s1782 + $0x120] sm:$0xff]
      %v1808 = vld [vmem:[%s1782 + $0x128] sm:$0xff]
      %v1809 = vld [vmem:[%s1782 + $0x138] sm:$0xff]
      %v1810 = vld [vmem:[%s1782 + $0x140] sm:$0xff]
      %v1811 = vld [vmem:[%s1782 + $0x150] sm:$0xff]
      %v1812 = vld [vmem:[%s1782 + $0x158] sm:$0xff]
      %v1813 = vld [vmem:[%s1782 + $0x168] sm:$0xff]
      %v1814 = vld [vmem:[%s1782 + $0x170] sm:$0xff]
      %v1815 = vpack.c.bf16 %v1784, %v1783
      %v1816 = vpack.c.bf16 %v1786, %v1785
      %v1817 = vpack.c.bf16 %v1788, %v1787
      %v1818 = vpack.c.bf16 %v1790, %v1789
      %v1819 = vpack.c.bf16 %v1792, %v1791
      %v1820 = vpack.c.bf16 %v1794, %v1793
      %v1821 = vpack.c.bf16 %v1796, %v1795
      %v1822 = vpack.c.bf16 %v1798, %v1797
      %v1823 = vpack.c.bf16 %v1800, %v1799
      %v1824 = vpack.c.bf16 %v1802, %v1801
      %v1825 = vpack.c.bf16 %v1804, %v1803
      %v1826 = vpack.c.bf16 %v1806, %v1805
      %v1827 = vpack.c.bf16 %v1808, %v1807
      %v1828 = vpack.c.bf16 %v1810, %v1809
      %v1829 = vpack.c.bf16 %v1812, %v1811
      %v1830 = vpack.c.bf16 %v1814, %v1813
      %1831 = vst.msk [vmem:[#allocation3] sm:$0xff] %vm347, %v1815
      %1832 = vst.msk [vmem:[#allocation3 + $0x8] sm:$0xff] %vm347, %v1816
      %1833 = vst.msk [vmem:[#allocation3 + $0x10] sm:$0xff] %vm347, %v1817
      %1834 = vst.msk [vmem:[#allocation3 + $0x18] sm:$0xff] %vm347, %v1818
      %1835 = vst.msk [vmem:[#allocation3 + $0x20] sm:$0xff] %vm347, %v1819
      %1836 = vst.msk [vmem:[#allocation3 + $0x28] sm:$0xff] %vm347, %v1820
      %1837 = vst.msk [vmem:[#allocation3 + $0x30] sm:$0xff] %vm347, %v1821
      %1838 = vst.msk [vmem:[#allocation3 + $0x38] sm:$0xff] %vm347, %v1822
      %1839 = vst.msk [vmem:[#allocation3 + $0x40] sm:$0xff] %vm347, %v1823
      %1840 = vst.msk [vmem:[#allocation3 + $0x48] sm:$0xff] %vm347, %v1824
      %1841 = vst.msk [vmem:[#allocation3 + $0x50] sm:$0xff] %vm347, %v1825
      %1842 = vst.msk [vmem:[#allocation3 + $0x58] sm:$0xff] %vm347, %v1826
      %1843 = vst.msk [vmem:[#allocation3 + $0x60] sm:$0xff] %vm347, %v1827
      %1844 = vst.msk [vmem:[#allocation3 + $0x68] sm:$0xff] %vm347, %v1828
      %1845 = vst.msk [vmem:[#allocation3 + $0x70] sm:$0xff] %vm347, %v1829
      %1846 = vst.msk [vmem:[#allocation3 + $0x78] sm:$0xff] %vm347, %v1830
      %v1847 = vld [vmem:[%s1782 + $0x1] sm:$0xff]
      %v1848 = vld [vmem:[%s1782 + $0x9] sm:$0xff]
      %v1849 = vld [vmem:[%s1782 + $0x19] sm:$0xff]
      %v1850 = vld [vmem:[%s1782 + $0x21] sm:$0xff]
      %v1851 = vld [vmem:[%s1782 + $0x31] sm:$0xff]
      %v1852 = vld [vmem:[%s1782 + $0x39] sm:$0xff]
      %v1853 = vld [vmem:[%s1782 + $0x49] sm:$0xff]
      %v1854 = vld [vmem:[%s1782 + $0x51] sm:$0xff]
      %v1855 = vld [vmem:[%s1782 + $0x61] sm:$0xff]
      %v1856 = vld [vmem:[%s1782 + $0x69] sm:$0xff]
      %v1857 = vld [vmem:[%s1782 + $0x79] sm:$0xff]
      %v1858 = vld [vmem:[%s1782 + $0x81] sm:$0xff]
      %v1859 = vld [vmem:[%s1782 + $0x91] sm:$0xff]
      %v1860 = vld [vmem:[%s1782 + $0x99] sm:$0xff]
      %v1861 = vld [vmem:[%s1782 + $0xa9] sm:$0xff]
      %v1862 = vld [vmem:[%s1782 + $0xb1] sm:$0xff]
      %v1863 = vld [vmem:[%s1782 + $0xc1] sm:$0xff]
      %v1864 = vld [vmem:[%s1782 + $0xc9] sm:$0xff]
      %v1865 = vld [vmem:[%s1782 + $0xd9] sm:$0xff]
      %v1866 = vld [vmem:[%s1782 + $0xe1] sm:$0xff]
      %v1867 = vld [vmem:[%s1782 + $0xf1] sm:$0xff]
      %v1868 = vld [vmem:[%s1782 + $0xf9] sm:$0xff]
      %v1869 = vld [vmem:[%s1782 + $0x109] sm:$0xff]
      %v1870 = vld [vmem:[%s1782 + $0x111] sm:$0xff]
      %v1871 = vld [vmem:[%s1782 + $0x121] sm:$0xff]
      %v1872 = vld [vmem:[%s1782 + $0x129] sm:$0xff]
      %v1873 = vld [vmem:[%s1782 + $0x139] sm:$0xff]
      %v1874 = vld [vmem:[%s1782 + $0x141] sm:$0xff]
      %v1875 = vld [vmem:[%s1782 + $0x151] sm:$0xff]
      %v1876 = vld [vmem:[%s1782 + $0x159] sm:$0xff]
      %v1877 = vld [vmem:[%s1782 + $0x169] sm:$0xff]
      %v1878 = vld [vmem:[%s1782 + $0x171] sm:$0xff]
      %v1879 = vpack.c.bf16 %v1848, %v1847
      %v1880 = vpack.c.bf16 %v1850, %v1849
      %v1881 = vpack.c.bf16 %v1852, %v1851
      %v1882 = vpack.c.bf16 %v1854, %v1853
      %v1883 = vpack.c.bf16 %v1856, %v1855
      %v1884 = vpack.c.bf16 %v1858, %v1857
      %v1885 = vpack.c.bf16 %v1860, %v1859
      %v1886 = vpack.c.bf16 %v1862, %v1861
      %v1887 = vpack.c.bf16 %v1864, %v1863
      %v1888 = vpack.c.bf16 %v1866, %v1865
      %v1889 = vpack.c.bf16 %v1868, %v1867
      %v1890 = vpack.c.bf16 %v1870, %v1869
      %v1891 = vpack.c.bf16 %v1872, %v1871
      %v1892 = vpack.c.bf16 %v1874, %v1873
      %v1893 = vpack.c.bf16 %v1876, %v1875
      %v1894 = vpack.c.bf16 %v1878, %v1877
      %1911 = vrot.lane.b32.xlu0 %v1879, 4
      %v1912 = vpop.permute.xlu0 %1911
      %1913 = vrot.lane.b32.xlu0 %v1880, 4
      %v1914 = vpop.permute.xlu0 %1913
      %1915 = vrot.lane.b32.xlu0 %v1881, 4
      %v1916 = vpop.permute.xlu0 %1915
      %1917 = vrot.lane.b32.xlu0 %v1882, 4
      %v1918 = vpop.permute.xlu0 %1917
      %1919 = vrot.lane.b32.xlu0 %v1883, 4
      %v1920 = vpop.permute.xlu0 %1919
      %1921 = vrot.lane.b32.xlu0 %v1884, 4
      %v1922 = vpop.permute.xlu0 %1921
      %1923 = vrot.lane.b32.xlu0 %v1885, 4
      %v1924 = vpop.permute.xlu0 %1923
      %1925 = vrot.lane.b32.xlu0 %v1886, 4
      %v1926 = vpop.permute.xlu0 %1925
      %1927 = vrot.lane.b32.xlu0 %v1887, 4
      %v1928 = vpop.permute.xlu0 %1927
      %1929 = vrot.lane.b32.xlu0 %v1888, 4
      %v1930 = vpop.permute.xlu0 %1929
      %1931 = vrot.lane.b32.xlu0 %v1889, 4
      %v1932 = vpop.permute.xlu0 %1931
      %1933 = vrot.lane.b32.xlu0 %v1890, 4
      %v1934 = vpop.permute.xlu0 %1933
      %1935 = vrot.lane.b32.xlu0 %v1891, 4
      %v1936 = vpop.permute.xlu0 %1935
      %1937 = vrot.lane.b32.xlu0 %v1892, 4
      %v1938 = vpop.permute.xlu0 %1937
      %1939 = vrot.lane.b32.xlu0 %v1893, 4
      %v1940 = vpop.permute.xlu0 %1939
      %1941 = vrot.lane.b32.xlu0 %v1894, 4
      %v1942 = vpop.permute.xlu0 %1941
      %1959 = vst.msk [vmem:[#allocation3] sm:$0xff] %vm843, %v1912
      %1960 = vst.msk [vmem:[#allocation3 + $0x8] sm:$0xff] %vm843, %v1914
      %1961 = vst.msk [vmem:[#allocation3 + $0x10] sm:$0xff] %vm843, %v1916
      %1962 = vst.msk [vmem:[#allocation3 + $0x18] sm:$0xff] %vm843, %v1918
      %1963 = vst.msk [vmem:[#allocation3 + $0x20] sm:$0xff] %vm843, %v1920
      %1964 = vst.msk [vmem:[#allocation3 + $0x28] sm:$0xff] %vm843, %v1922
      %1965 = vst.msk [vmem:[#allocation3 + $0x30] sm:$0xff] %vm843, %v1924
      %1966 = vst.msk [vmem:[#allocation3 + $0x38] sm:$0xff] %vm843, %v1926
      %1967 = vst.msk [vmem:[#allocation3 + $0x40] sm:$0xff] %vm843, %v1928
      %1968 = vst.msk [vmem:[#allocation3 + $0x48] sm:$0xff] %vm843, %v1930
      %1969 = vst.msk [vmem:[#allocation3 + $0x50] sm:$0xff] %vm843, %v1932
      %1970 = vst.msk [vmem:[#allocation3 + $0x58] sm:$0xff] %vm843, %v1934
      %1971 = vst.msk [vmem:[#allocation3 + $0x60] sm:$0xff] %vm843, %v1936
      %1972 = vst.msk [vmem:[#allocation3 + $0x68] sm:$0xff] %vm843, %v1938
      %1973 = vst.msk [vmem:[#allocation3 + $0x70] sm:$0xff] %vm843, %v1940
      %1974 = vst.msk [vmem:[#allocation3 + $0x78] sm:$0xff] %vm843, %v1942
      %v1975 = vld [vmem:[%s1782 + $0x2] sm:$0xff]
      %v1976 = vld [vmem:[%s1782 + $0xa] sm:$0xff]
      %v1977 = vld [vmem:[%s1782 + $0x1a] sm:$0xff]
      %v1978 = vld [vmem:[%s1782 + $0x22] sm:$0xff]
      %v1979 = vld [vmem:[%s1782 + $0x32] sm:$0xff]
      %v1980 = vld [vmem:[%s1782 + $0x3a] sm:$0xff]
      %v1981 = vld [vmem:[%s1782 + $0x4a] sm:$0xff]
      %v1982 = vld [vmem:[%s1782 + $0x52] sm:$0xff]
      %v1983 = vld [vmem:[%s1782 + $0x62] sm:$0xff]
      %v1984 = vld [vmem:[%s1782 + $0x6a] sm:$0xff]
      %v1985 = vld [vmem:[%s1782 + $0x7a] sm:$0xff]
      %v1986 = vld [vmem:[%s1782 + $0x82] sm:$0xff]
      %v1987 = vld [vmem:[%s1782 + $0x92] sm:$0xff]
      %v1988 = vld [vmem:[%s1782 + $0x9a] sm:$0xff]
      %v1989 = vld [vmem:[%s1782 + $0xaa] sm:$0xff]
      %v1990 = vld [vmem:[%s1782 + $0xb2] sm:$0xff]
      %v1991 = vld [vmem:[%s1782 + $0xc2] sm:$0xff]
      %v1992 = vld [vmem:[%s1782 + $0xca] sm:$0xff]
      %v1993 = vld [vmem:[%s1782 + $0xda] sm:$0xff]
      %v1994 = vld [vmem:[%s1782 + $0xe2] sm:$0xff]
      %v1995 = vld [vmem:[%s1782 + $0xf2] sm:$0xff]
      %v1996 = vld [vmem:[%s1782 + $0xfa] sm:$0xff]
      %v1997 = vld [vmem:[%s1782 + $0x10a] sm:$0xff]
      %v1998 = vld [vmem:[%s1782 + $0x112] sm:$0xff]
      %v1999 = vld [vmem:[%s1782 + $0x122] sm:$0xff]
      %v2000 = vld [vmem:[%s1782 + $0x12a] sm:$0xff]
      %v2001 = vld [vmem:[%s1782 + $0x13a] sm:$0xff]
      %v2002 = vld [vmem:[%s1782 + $0x142] sm:$0xff]
      %v2003 = vld [vmem:[%s1782 + $0x152] sm:$0xff]
      %v2004 = vld [vmem:[%s1782 + $0x15a] sm:$0xff]
      %v2005 = vld [vmem:[%s1782 + $0x16a] sm:$0xff]
      %v2006 = vld [vmem:[%s1782 + $0x172] sm:$0xff]
      %v2007 = vpack.c.bf16 %v1976, %v1975
      %v2008 = vpack.c.bf16 %v1978, %v1977
      %v2009 = vpack.c.bf16 %v1980, %v1979
      %v2010 = vpack.c.bf16 %v1982, %v1981
      %v2011 = vpack.c.bf16 %v1984, %v1983
      %v2012 = vpack.c.bf16 %v1986, %v1985
      %v2013 = vpack.c.bf16 %v1988, %v1987
      %v2014 = vpack.c.bf16 %v1990, %v1989
      %v2015 = vpack.c.bf16 %v1992, %v1991
      %v2016 = vpack.c.bf16 %v1994, %v1993
      %v2017 = vpack.c.bf16 %v1996, %v1995
      %v2018 = vpack.c.bf16 %v1998, %v1997
      %v2019 = vpack.c.bf16 %v2000, %v1999
      %v2020 = vpack.c.bf16 %v2002, %v2001
      %v2021 = vpack.c.bf16 %v2004, %v2003
      %v2022 = vpack.c.bf16 %v2006, %v2005
      %2039 = vrot.lane.b32.xlu0 %v2007, 8
      %v2040 = vpop.permute.xlu0 %2039
      %2041 = vrot.lane.b32.xlu0 %v2008, 8
      %v2042 = vpop.permute.xlu0 %2041
      %2043 = vrot.lane.b32.xlu0 %v2009, 8
      %v2044 = vpop.permute.xlu0 %2043
      %2045 = vrot.lane.b32.xlu0 %v2010, 8
      %v2046 = vpop.permute.xlu0 %2045
      %2047 = vrot.lane.b32.xlu0 %v2011, 8
      %v2048 = vpop.permute.xlu0 %2047
      %2049 = vrot.lane.b32.xlu0 %v2012, 8
      %v2050 = vpop.permute.xlu0 %2049
      %2051 = vrot.lane.b32.xlu0 %v2013, 8
      %v2052 = vpop.permute.xlu0 %2051
      %2053 = vrot.lane.b32.xlu0 %v2014, 8
      %v2054 = vpop.permute.xlu0 %2053
      %2055 = vrot.lane.b32.xlu0 %v2015, 8
      %v2056 = vpop.permute.xlu0 %2055
      %2057 = vrot.lane.b32.xlu0 %v2016, 8
      %v2058 = vpop.permute.xlu0 %2057
      %2059 = vrot.lane.b32.xlu0 %v2017, 8
      %v2060 = vpop.permute.xlu0 %2059
      %2061 = vrot.lane.b32.xlu0 %v2018, 8
      %v2062 = vpop.permute.xlu0 %2061
      %2063 = vrot.lane.b32.xlu0 %v2019, 8
      %v2064 = vpop.permute.xlu0 %2063
      %2065 = vrot.lane.b32.xlu0 %v2020, 8
      %v2066 = vpop.permute.xlu0 %2065
      %2067 = vrot.lane.b32.xlu0 %v2021, 8
      %v2068 = vpop.permute.xlu0 %2067
      %2069 = vrot.lane.b32.xlu0 %v2022, 8
      %v2070 = vpop.permute.xlu0 %2069
      %2087 = vst.msk [vmem:[#allocation3] sm:$0xff] %vm972, %v2040
      %2088 = vst.msk [vmem:[#allocation3 + $0x8] sm:$0xff] %vm972, %v2042
      %2089 = vst.msk [vmem:[#allocation3 + $0x10] sm:$0xff] %vm972, %v2044
      %2090 = vst.msk [vmem:[#allocation3 + $0x18] sm:$0xff] %vm972, %v2046
      %2091 = vst.msk [vmem:[#allocation3 + $0x20] sm:$0xff] %vm972, %v2048
      %2092 = vst.msk [vmem:[#allocation3 + $0x28] sm:$0xff] %vm972, %v2050
      %2093 = vst.msk [vmem:[#allocation3 + $0x30] sm:$0xff] %vm972, %v2052
      %2094 = vst.msk [vmem:[#allocation3 + $0x38] sm:$0xff] %vm972, %v2054
      %2095 = vst.msk [vmem:[#allocation3 + $0x40] sm:$0xff] %vm972, %v2056
      %2096 = vst.msk [vmem:[#allocation3 + $0x48] sm:$0xff] %vm972, %v2058
      %2097 = vst.msk [vmem:[#allocation3 + $0x50] sm:$0xff] %vm972, %v2060
      %2098 = vst.msk [vmem:[#allocation3 + $0x58] sm:$0xff] %vm972, %v2062
      %2099 = vst.msk [vmem:[#allocation3 + $0x60] sm:$0xff] %vm972, %v2064
      %2100 = vst.msk [vmem:[#allocation3 + $0x68] sm:$0xff] %vm972, %v2066
      %2101 = vst.msk [vmem:[#allocation3 + $0x70] sm:$0xff] %vm972, %v2068
      %2102 = vst.msk [vmem:[#allocation3 + $0x78] sm:$0xff] %vm972, %v2070
      %v2103 = vld [vmem:[#allocation3] sm:$0xff]
      %v2104 = vld [vmem:[#allocation3 + $0x8] sm:$0xff]
      %v2105 = vld [vmem:[#allocation3 + $0x10] sm:$0xff]
      %v2106 = vld [vmem:[#allocation3 + $0x18] sm:$0xff]
      %v2107 = vld [vmem:[#allocation3 + $0x20] sm:$0xff]
      %v2108 = vld [vmem:[#allocation3 + $0x28] sm:$0xff]
      %v2109 = vld [vmem:[#allocation3 + $0x30] sm:$0xff]
      %v2110 = vld [vmem:[#allocation3 + $0x38] sm:$0xff]
      %v2111 = vld [vmem:[#allocation3 + $0x40] sm:$0xff]
      %v2112 = vld [vmem:[#allocation3 + $0x48] sm:$0xff]
      %v2113 = vld [vmem:[#allocation3 + $0x50] sm:$0xff]
      %v2114 = vld [vmem:[#allocation3 + $0x58] sm:$0xff]
      %v2115 = vld [vmem:[#allocation3 + $0x60] sm:$0xff]
      %v2116 = vld [vmem:[#allocation3 + $0x68] sm:$0xff]
      %v2117 = vld [vmem:[#allocation3 + $0x70] sm:$0xff]
      %v2118 = vld [vmem:[#allocation3 + $0x78] sm:$0xff]
      %s2119 = scalar_lea.vmem %s3, 16
      %v2120 = vld [vmem:[%s2119] sm:$0xf]
      %v2121 = vld [vmem:[%s2119 + $0x4] sm:$0x3]
      %v2124 = vunpack.c.l.b16 %v2120
      %v2125 = vunpack.c.l.b16 %v2121
      %v2126 = vpack.c.b16 %v2125, %v2124
      %v2128 = vsel %vm1351, %v2103, 0
      %v2131 = vsel %vm1351, %v2104, 0
      %v2134 = vsel %vm1351, %v2105, 0
      %v2137 = vsel %vm1351, %v2106, 0
      %v2140 = vsel %vm1351, %v2107, 0
      %v2143 = vsel %vm1351, %v2108, 0
      %v2146 = vsel %vm1351, %v2109, 0
      %v2149 = vsel %vm1351, %v2110, 0
      %v2152 = vsel %vm1351, %v2111, 0
      %v2155 = vsel %vm1351, %v2112, 0
      %v2158 = vsel %vm1351, %v2113, 0
      %v2161 = vsel %vm1351, %v2114, 0
      %v2164 = vsel %vm1351, %v2115, 0
      %v2167 = vsel %vm1351, %v2116, 0
      %v2170 = vsel %vm1351, %v2117, 0
      %v2173 = vsel %vm1351, %v2118, 0
      %v2176 = vsel %vm1400, %v2126, 0
      %2178 = vmatprep.subr.bf16.mxu0 0
      %2179 = vmatpush1.bf16.msra.mxu0 %v2176
      %2180 = vmatprep.subr.bf16.mxu0 0
      %2181 = vmatpush1.bf16.msra.mxu0 0
      %2182 = vmatprep.subr.bf16.mxu0 0
      %2183 = vmatpush1.bf16.msra.mxu0 0
      %2184 = vmatprep.subr.bf16.mxu0 0
      %2185 = vmatpush1.bf16.msra.mxu0 0
      %2186 = vmatprep.subr.bf16.mxu0 0
      %2187 = vmatpush1.bf16.msra.mxu0 0
      %2188 = vmatprep.subr.bf16.mxu0 0
      %2189 = vmatpush1.bf16.msra.mxu0 0
      %2190 = vmatprep.subr.bf16.mxu0 0
      %2191 = vmatpush1.bf16.msra.mxu0 0
      %2192 = vmatprep.subr.bf16.mxu0 0
      %2193 = vmatpush1.bf16.msra.mxu0 0
      %2194 = vmatprep.subr.bf16.mxu0 0
      %2195 = vmatpush1.bf16.msra.mxu0 0
      %2196 = vmatprep.subr.bf16.mxu0 0
      %2197 = vmatpush1.bf16.msra.mxu0 0
      %2198 = vmatprep.subr.bf16.mxu0 0
      %2199 = vmatpush1.bf16.msra.mxu0 0
      %2200 = vmatprep.subr.bf16.mxu0 0
      %2201 = vmatpush1.bf16.msra.mxu0 0
      %2202 = vmatprep.subr.bf16.mxu0 0
      %2203 = vmatpush1.bf16.msra.mxu0 0
      %2204 = vmatprep.subr.bf16.mxu0 0
      %2205 = vmatpush1.bf16.msra.mxu0 0
      %2206 = vmatprep.subr.bf16.mxu0 0
      %2207 = vmatpush1.bf16.msra.mxu0 0
      %2208 = vmatprep.subr.bf16.mxu0 0
      %2209 = vmatpush1.bf16.msra.mxu0 0
      %2210 = vmatprep.mubr.bf16.mxu0 0
      %2211 = vmatmul.mubr.bf16.gmra.mrb[0].mxu0 %v2128
      %v2212 = vpop.f32.mrb[0].mxu0
      %v2213 = vadd.f32 0.0, %v2212
      %v2214 = vpop.f32.mrb[0].mxu0
      %v2215 = vpop.f32.mrb[0].mxu0
      %v2216 = vadd.f32 0.0, %v2215
      %v2217 = vpop.f32.mrb[0].mxu0
      %2218 = vmatprep.mubr.bf16.mxu0 0
      %2219 = vmatmul.mubr.bf16.gmra.mrb[0].mxu0 %v2131
      %v2220 = vpop.f32.mrb[0].mxu0
      %v2221 = vadd.f32 0.0, %v2220
      %v2222 = vpop.f32.mrb[0].mxu0
      %v2223 = vpop.f32.mrb[0].mxu0
      %v2224 = vadd.f32 0.0, %v2223
      %v2225 = vpop.f32.mrb[0].mxu0
      %2226 = vmatprep.mubr.bf16.mxu0 0
      %2227 = vmatmul.mubr.bf16.gmra.mrb[0].mxu0 %v2134
      %v2228 = vpop.f32.mrb[0].mxu0
      %v2229 = vadd.f32 0.0, %v2228
      %v2230 = vpop.f32.mrb[0].mxu0
      %v2231 = vpop.f32.mrb[0].mxu0
      %v2232 = vadd.f32 0.0, %v2231
      %v2233 = vpop.f32.mrb[0].mxu0
      %2234 = vmatprep.mubr.bf16.mxu0 0
      %2235 = vmatmul.mubr.bf16.gmra.mrb[0].mxu0 %v2137
      %v2236 = vpop.f32.mrb[0].mxu0
      %v2237 = vadd.f32 0.0, %v2236
      %v2238 = vpop.f32.mrb[0].mxu0
      %v2239 = vpop.f32.mrb[0].mxu0
      %v2240 = vadd.f32 0.0, %v2239
      %v2241 = vpop.f32.mrb[0].mxu0
      %2242 = vmatprep.mubr.bf16.mxu0 0
      %2243 = vmatmul.mubr.bf16.gmra.mrb[0].mxu0 %v2140
      %v2244 = vpop.f32.mrb[0].mxu0
      %v2245 = vadd.f32 0.0, %v2244
      %v2246 = vpop.f32.mrb[0].mxu0
      %v2247 = vpop.f32.mrb[0].mxu0
      %v2248 = vadd.f32 0.0, %v2247
      %v2249 = vpop.f32.mrb[0].mxu0
      %2250 = vmatprep.mubr.bf16.mxu0 0
      %2251 = vmatmul.mubr.bf16.gmra.mrb[0].mxu0 %v2143
      %v2252 = vpop.f32.mrb[0].mxu0
      %v2253 = vadd.f32 0.0, %v2252
      %v2254 = vpop.f32.mrb[0].mxu0
      %v2255 = vpop.f32.mrb[0].mxu0
      %v2256 = vadd.f32 0.0, %v2255
      %v2257 = vpop.f32.mrb[0].mxu0
      %2258 = vmatprep.mubr.bf16.mxu0 0
      %2259 = vmatmul.mubr.bf16.gmra.mrb[0].mxu0 %v2146
      %v2260 = vpop.f32.mrb[0].mxu0
      %v2261 = vadd.f32 0.0, %v2260
      %v2262 = vpop.f32.mrb[0].mxu0
      %v2263 = vpop.f32.mrb[0].mxu0
      %v2264 = vadd.f32 0.0, %v2263
      %v2265 = vpop.f32.mrb[0].mxu0
      %2266 = vmatprep.mubr.bf16.mxu0 0
      %2267 = vmatmul.mubr.bf16.gmra.mrb[0].mxu0 %v2149
      %v2268 = vpop.f32.mrb[0].mxu0
      %v2269 = vadd.f32 0.0, %v2268
      %v2270 = vpop.f32.mrb[0].mxu0
      %v2271 = vpop.f32.mrb[0].mxu0
      %v2272 = vadd.f32 0.0, %v2271
      %v2273 = vpop.f32.mrb[0].mxu0
      %2274 = vmatprep.mubr.bf16.mxu0 0
      %2275 = vmatmul.mubr.bf16.gmra.mrb[0].mxu0 %v2152
      %v2276 = vpop.f32.mrb[0].mxu0
      %v2277 = vadd.f32 0.0, %v2276
      %v2278 = vpop.f32.mrb[0].mxu0
      %v2279 = vpop.f32.mrb[0].mxu0
      %v2280 = vadd.f32 0.0, %v2279
      %v2281 = vpop.f32.mrb[0].mxu0
      %2282 = vmatprep.mubr.bf16.mxu0 0
      %2283 = vmatmul.mubr.bf16.gmra.mrb[0].mxu0 %v2155
      %v2284 = vpop.f32.mrb[0].mxu0
      %v2285 = vadd.f32 0.0, %v2284
      %v2286 = vpop.f32.mrb[0].mxu0
      %v2287 = vpop.f32.mrb[0].mxu0
      %v2288 = vadd.f32 0.0, %v2287
      %v2289 = vpop.f32.mrb[0].mxu0
      %2290 = vmatprep.mubr.bf16.mxu0 0
      %2291 = vmatmul.mubr.bf16.gmra.mrb[0].mxu0 %v2158
      %v2292 = vpop.f32.mrb[0].mxu0
      %v2293 = vadd.f32 0.0, %v2292
      %v2294 = vpop.f32.mrb[0].mxu0
      %v2295 = vpop.f32.mrb[0].mxu0
      %v2296 = vadd.f32 0.0, %v2295
      %v2297 = vpop.f32.mrb[0].mxu0
      %2298 = vmatprep.mubr.bf16.mxu0 0
      %2299 = vmatmul.mubr.bf16.gmra.mrb[0].mxu0 %v2161
      %v2300 = vpop.f32.mrb[0].mxu0
      %v2301 = vadd.f32 0.0, %v2300
      %v2302 = vpop.f32.mrb[0].mxu0
      %v2303 = vpop.f32.mrb[0].mxu0
      %v2304 = vadd.f32 0.0, %v2303
      %v2305 = vpop.f32.mrb[0].mxu0
      %2306 = vmatprep.mubr.bf16.mxu0 0
      %2307 = vmatmul.mubr.bf16.gmra.mrb[0].mxu0 %v2164
      %v2308 = vpop.f32.mrb[0].mxu0
      %v2309 = vadd.f32 0.0, %v2308
      %v2310 = vpop.f32.mrb[0].mxu0
      %v2311 = vpop.f32.mrb[0].mxu0
      %v2312 = vadd.f32 0.0, %v2311
      %v2313 = vpop.f32.mrb[0].mxu0
      %2314 = vmatprep.mubr.bf16.mxu0 0
      %2315 = vmatmul.mubr.bf16.gmra.mrb[0].mxu0 %v2167
      %v2316 = vpop.f32.mrb[0].mxu0
      %v2317 = vadd.f32 0.0, %v2316
      %v2318 = vpop.f32.mrb[0].mxu0
      %v2319 = vpop.f32.mrb[0].mxu0
      %v2320 = vadd.f32 0.0, %v2319
      %v2321 = vpop.f32.mrb[0].mxu0
      %2322 = vmatprep.mubr.bf16.mxu0 0
      %2323 = vmatmul.mubr.bf16.gmra.mrb[0].mxu0 %v2170
      %v2324 = vpop.f32.mrb[0].mxu0
      %v2325 = vadd.f32 0.0, %v2324
      %v2326 = vpop.f32.mrb[0].mxu0
      %v2327 = vpop.f32.mrb[0].mxu0
      %v2328 = vadd.f32 0.0, %v2327
      %v2329 = vpop.f32.mrb[0].mxu0
      %2330 = vmatprep.mubr.bf16.mxu0 0
      %2331 = vmatmul.mubr.bf16.gmra.mrb[0].mxu0 %v2173
      %v2332 = vpop.f32.mrb[0].mxu0
      %v2333 = vadd.f32 0.0, %v2332
      %v2334 = vpop.f32.mrb[0].mxu0
      %v2335 = vpop.f32.mrb[0].mxu0
      %v2336 = vadd.f32 0.0, %v2335
      %v2337 = vpop.f32.mrb[0].mxu0
      %2338 = vdwg.mxu0
      %v2339 = vadd.f32 %v1656, %v2213
      %v2340 = vadd.f32 %v1659, %v2216
      %v2341 = vadd.f32 %v1664, %v2221
      %v2342 = vadd.f32 %v1667, %v2224
      %v2343 = vadd.f32 %v1672, %v2229
      %v2344 = vadd.f32 %v1675, %v2232
      %v2345 = vadd.f32 %v1680, %v2237
      %v2346 = vadd.f32 %v1683, %v2240
      %v2347 = vadd.f32 %v1688, %v2245
      %v2348 = vadd.f32 %v1691, %v2248
      %v2349 = vadd.f32 %v1696, %v2253
      %v2350 = vadd.f32 %v1699, %v2256
      %v2351 = vadd.f32 %v1704, %v2261
      %v2352 = vadd.f32 %v1707, %v2264
      %v2353 = vadd.f32 %v1712, %v2269
      %v2354 = vadd.f32 %v1715, %v2272
      %v2355 = vadd.f32 %v1720, %v2277
      %v2356 = vadd.f32 %v1723, %v2280
      %v2357 = vadd.f32 %v1728, %v2285
      %v2358 = vadd.f32 %v1731, %v2288
      %v2359 = vadd.f32 %v1736, %v2293
      %v2360 = vadd.f32 %v1739, %v2296
      %v2361 = vadd.f32 %v1744, %v2301
      %v2362 = vadd.f32 %v1747, %v2304
      %v2363 = vadd.f32 %v1752, %v2309
      %v2364 = vadd.f32 %v1755, %v2312
      %v2365 = vadd.f32 %v1760, %v2317
      %v2366 = vadd.f32 %v1763, %v2320
      %v2367 = vadd.f32 %v1768, %v2325
      %v2368 = vadd.f32 %v1771, %v2328
      %v2369 = vadd.f32 %v1776, %v2333
      %v2370 = vadd.f32 %v1779, %v2336
      %v2371 = vld [vmem:[%s4] sm:$0x1]
      %v2373 = vlaneseq
      %v2374 = vshrl.u32 %v2373, 7
      %v2375 = vsub.s32 0, %v2374
      %v2376 = vrot.slane %v2371, %v2375
      %v2378 = vadd.f32 %v2339, %v2376
      %v2379 = vadd.f32 %v2340, %v2376
      %v2380 = vadd.f32 %v2341, %v2376
      %v2381 = vadd.f32 %v2342, %v2376
      %v2382 = vadd.f32 %v2343, %v2376
      %v2383 = vadd.f32 %v2344, %v2376
      %v2384 = vadd.f32 %v2345, %v2376
      %v2385 = vadd.f32 %v2346, %v2376
      %v2386 = vadd.f32 %v2347, %v2376
      %v2387 = vadd.f32 %v2348, %v2376
      %v2388 = vadd.f32 %v2349, %v2376
      %v2389 = vadd.f32 %v2350, %v2376
      %v2390 = vadd.f32 %v2351, %v2376
      %v2391 = vadd.f32 %v2352, %v2376
      %v2392 = vadd.f32 %v2353, %v2376
      %v2393 = vadd.f32 %v2354, %v2376
      %v2394 = vadd.f32 %v2355, %v2376
      %v2395 = vadd.f32 %v2356, %v2376
      %v2396 = vadd.f32 %v2357, %v2376
      %v2397 = vadd.f32 %v2358, %v2376
      %v2398 = vadd.f32 %v2359, %v2376
      %v2399 = vadd.f32 %v2360, %v2376
      %v2400 = vadd.f32 %v2361, %v2376
      %v2401 = vadd.f32 %v2362, %v2376
      %v2402 = vadd.f32 %v2363, %v2376
      %v2403 = vadd.f32 %v2364, %v2376
      %v2404 = vadd.f32 %v2365, %v2376
      %v2405 = vadd.f32 %v2366, %v2376
      %v2406 = vadd.f32 %v2367, %v2376
      %v2407 = vadd.f32 %v2368, %v2376
      %v2408 = vadd.f32 %v2369, %v2376
      %v2409 = vadd.f32 %v2370, %v2376
      %v2410 = vmax.f32 %v2378, 0.0
      %v2411 = vmax.f32 %v2379, 0.0
      %v2412 = vmax.f32 %v2380, 0.0
      %v2413 = vmax.f32 %v2381, 0.0
      %v2414 = vmax.f32 %v2382, 0.0
      %v2415 = vmax.f32 %v2383, 0.0
      %v2416 = vmax.f32 %v2384, 0.0
      %v2417 = vmax.f32 %v2385, 0.0
      %v2418 = vmax.f32 %v2386, 0.0
      %v2419 = vmax.f32 %v2387, 0.0
      %v2420 = vmax.f32 %v2388, 0.0
      %v2421 = vmax.f32 %v2389, 0.0
      %v2422 = vmax.f32 %v2390, 0.0
      %v2423 = vmax.f32 %v2391, 0.0
      %v2424 = vmax.f32 %v2392, 0.0
      %v2425 = vmax.f32 %v2393, 0.0
      %v2426 = vmax.f32 %v2394, 0.0
      %v2427 = vmax.f32 %v2395, 0.0
      %v2428 = vmax.f32 %v2396, 0.0
      %v2429 = vmax.f32 %v2397, 0.0
      %v2430 = vmax.f32 %v2398, 0.0
      %v2431 = vmax.f32 %v2399, 0.0
      %v2432 = vmax.f32 %v2400, 0.0
      %v2433 = vmax.f32 %v2401, 0.0
      %v2434 = vmax.f32 %v2402, 0.0
      %v2435 = vmax.f32 %v2403, 0.0
      %v2436 = vmax.f32 %v2404, 0.0
      %v2437 = vmax.f32 %v2405, 0.0
      %v2438 = vmax.f32 %v2406, 0.0
      %v2439 = vmax.f32 %v2407, 0.0
      %v2440 = vmax.f32 %v2408, 0.0
      %v2441 = vmax.f32 %v2409, 0.0
      %v2442 = vpack.c.bf16 %v2411, %v2410
      %v2443 = vpack.c.bf16 %v2413, %v2412
      %v2444 = vpack.c.bf16 %v2415, %v2414
      %v2445 = vpack.c.bf16 %v2417, %v2416
      %v2446 = vpack.c.bf16 %v2419, %v2418
      %v2447 = vpack.c.bf16 %v2421, %v2420
      %v2448 = vpack.c.bf16 %v2423, %v2422
      %v2449 = vpack.c.bf16 %v2425, %v2424
      %v2450 = vpack.c.bf16 %v2427, %v2426
      %v2451 = vpack.c.bf16 %v2429, %v2428
      %v2452 = vpack.c.bf16 %v2431, %v2430
      %v2453 = vpack.c.bf16 %v2433, %v2432
      %v2454 = vpack.c.bf16 %v2435, %v2434
      %v2455 = vpack.c.bf16 %v2437, %v2436
      %v2456 = vpack.c.bf16 %v2439, %v2438
      %v2457 = vpack.c.bf16 %v2441, %v2440
      %v2474 = vunpack.c.l.b16 %v2442
      %v2475 = vunpack.c.h.b16 %v2442
      %v2476 = vunpack.c.l.b16 %v2443
      %v2477 = vunpack.c.h.b16 %v2443
      %v2478 = vunpack.c.l.b16 %v2444
      %v2479 = vunpack.c.h.b16 %v2444
      %v2480 = vunpack.c.l.b16 %v2445
      %v2481 = vunpack.c.h.b16 %v2445
      %v2482 = vunpack.c.l.b16 %v2446
      %v2483 = vunpack.c.h.b16 %v2446
      %v2484 = vunpack.c.l.b16 %v2447
      %v2485 = vunpack.c.h.b16 %v2447
      %v2486 = vunpack.c.l.b16 %v2448
      %v2487 = vunpack.c.h.b16 %v2448
      %v2488 = vunpack.c.l.b16 %v2449
      %v2489 = vunpack.c.h.b16 %v2449
      %v2490 = vunpack.c.l.b16 %v2450
      %v2491 = vunpack.c.h.b16 %v2450
      %v2492 = vunpack.c.l.b16 %v2451
      %v2493 = vunpack.c.h.b16 %v2451
      %v2494 = vunpack.c.l.b16 %v2452
      %v2495 = vunpack.c.h.b16 %v2452
      %v2496 = vunpack.c.l.b16 %v2453
      %v2497 = vunpack.c.h.b16 %v2453
      %v2498 = vunpack.c.l.b16 %v2454
      %v2499 = vunpack.c.h.b16 %v2454
      %v2500 = vunpack.c.l.b16 %v2455
      %v2501 = vunpack.c.h.b16 %v2455
      %v2502 = vunpack.c.l.b16 %v2456
      %v2503 = vunpack.c.h.b16 %v2456
      %v2504 = vunpack.c.l.b16 %v2457
      %v2505 = vunpack.c.h.b16 %v2457
      %v2506 = vpack.c.b16 %v2474, %v2474
      %v2507 = vpack.c.b16 %v2475, %v2475
      %v2508 = vpack.c.b16 %v2476, %v2476
      %v2509 = vpack.c.b16 %v2477, %v2477
      %v2510 = vpack.c.b16 %v2478, %v2478
      %v2511 = vpack.c.b16 %v2479, %v2479
      %v2512 = vpack.c.b16 %v2480, %v2480
      %v2513 = vpack.c.b16 %v2481, %v2481
      %v2514 = vpack.c.b16 %v2482, %v2482
      %v2515 = vpack.c.b16 %v2483, %v2483
      %v2516 = vpack.c.b16 %v2484, %v2484
      %v2517 = vpack.c.b16 %v2485, %v2485
      %v2518 = vpack.c.b16 %v2486, %v2486
      %v2519 = vpack.c.b16 %v2487, %v2487
      %v2520 = vpack.c.b16 %v2488, %v2488
      %v2521 = vpack.c.b16 %v2489, %v2489
      %v2522 = vpack.c.b16 %v2490, %v2490
      %v2523 = vpack.c.b16 %v2491, %v2491
      %v2524 = vpack.c.b16 %v2492, %v2492
      %v2525 = vpack.c.b16 %v2493, %v2493
      %v2526 = vpack.c.b16 %v2494, %v2494
      %v2527 = vpack.c.b16 %v2495, %v2495
      %v2528 = vpack.c.b16 %v2496, %v2496
      %v2529 = vpack.c.b16 %v2497, %v2497
      %v2530 = vpack.c.b16 %v2498, %v2498
      %v2531 = vpack.c.b16 %v2499, %v2499
      %v2532 = vpack.c.b16 %v2500, %v2500
      %v2533 = vpack.c.b16 %v2501, %v2501
      %v2534 = vpack.c.b16 %v2502, %v2502
      %v2535 = vpack.c.b16 %v2503, %v2503
      %v2536 = vpack.c.b16 %v2504, %v2504
      %v2537 = vpack.c.b16 %v2505, %v2505
      %vm2570 = vcmask 27648
      %2571 = vst.msk [vmem:[%s224] sm:$0xf] %vm2570, %v2506
      %2572 = vst.msk [vmem:[%s224 + $0x4] sm:$0xf] %vm2570, %v2507
      %2573 = vst.msk [vmem:[%s224 + $0x8] sm:$0xf] %vm2570, %v2508
      %2574 = vst.msk [vmem:[%s224 + $0xc] sm:$0xf] %vm2570, %v2509
      %2575 = vst.msk [vmem:[%s224 + $0x10] sm:$0xf] %vm2570, %v2510
      %2576 = vst.msk [vmem:[%s224 + $0x14] sm:$0xf] %vm2570, %v2511
      %2577 = vst.msk [vmem:[%s224 + $0x18] sm:$0xf] %vm2570, %v2512
      %2578 = vst.msk [vmem:[%s224 + $0x1c] sm:$0xf] %vm2570, %v2513
      %2579 = vst.msk [vmem:[%s224 + $0x20] sm:$0xf] %vm2570, %v2514
      %2580 = vst.msk [vmem:[%s224 + $0x24] sm:$0xf] %vm2570, %v2515
      %2581 = vst.msk [vmem:[%s224 + $0x28] sm:$0xf] %vm2570, %v2516
      %2582 = vst.msk [vmem:[%s224 + $0x2c] sm:$0xf] %vm2570, %v2517
      %2583 = vst.msk [vmem:[%s224 + $0x30] sm:$0xf] %vm2570, %v2518
      %2584 = vst.msk [vmem:[%s224 + $0x34] sm:$0xf] %vm2570, %v2519
      %2585 = vst.msk [vmem:[%s224 + $0x38] sm:$0xf] %vm2570, %v2520
      %2586 = vst.msk [vmem:[%s224 + $0x3c] sm:$0xf] %vm2570, %v2521
      %2587 = vst.msk [vmem:[%s224 + $0x40] sm:$0xf] %vm2570, %v2522
      %2588 = vst.msk [vmem:[%s224 + $0x44] sm:$0xf] %vm2570, %v2523
      %2589 = vst.msk [vmem:[%s224 + $0x48] sm:$0xf] %vm2570, %v2524
      %2590 = vst.msk [vmem:[%s224 + $0x4c] sm:$0xf] %vm2570, %v2525
      %2591 = vst.msk [vmem:[%s224 + $0x50] sm:$0xf] %vm2570, %v2526
      %2592 = vst.msk [vmem:[%s224 + $0x54] sm:$0xf] %vm2570, %v2527
      %2593 = vst.msk [vmem:[%s224 + $0x58] sm:$0xf] %vm2570, %v2528
      %2594 = vst.msk [vmem:[%s224 + $0x5c] sm:$0xf] %vm2570, %v2529
      %2595 = vst.msk [vmem:[%s224 + $0x60] sm:$0xf] %vm2570, %v2530
      %2596 = vst.msk [vmem:[%s224 + $0x64] sm:$0xf] %vm2570, %v2531
      %2597 = vst.msk [vmem:[%s224 + $0x68] sm:$0xf] %vm2570, %v2532
      %2598 = vst.msk [vmem:[%s224 + $0x6c] sm:$0xf] %vm2570, %v2533
      %2599 = vst.msk [vmem:[%s224 + $0x70] sm:$0xf] %vm2570, %v2534
      %2600 = vst.msk [vmem:[%s224 + $0x74] sm:$0xf] %vm2570, %v2535
      %2601 = vst.msk [vmem:[%s224 + $0x78] sm:$0xf] %vm2570, %v2536
      %2602 = vst.msk [vmem:[%s224 + $0x7c] sm:$0xf] %vm2570, %v2537
      %s2603 = smul.u32 32, %s16
      %p2604 = scmp.lt.s32.totalorder %s2603, 63
      %s2605 = scalar_select %p2604, %s2603, 63
      %s2606 = smul.addr %s2605, 4
      %s2607 = scalar_lea.vmem %s5, %s2606
      // Predicated region
      $region41: #{tpu_custom_call.1} parent=39 // pred_check
        %p2608 = pneg %p144
      $region42: #{tpu_custom_call.1} parent=39 // pred_check_branch
        %2610 = sbr.rel (%p2608) target = $region44
      $region43: #{tpu_custom_call.1} parent=39 // pred_region
        %s2611 = smul.u32 32, %s16
      $region44: #{tpu_custom_call.1} parent=39 // pred_fallthru
        _
    $region40: #{tpu_custom_call.1} parent=5 // pred_fallthru
      _
    %p2612 = scmp.le.s32.totalorder 2, %s11
    // Predicated region
    $region45: #{tpu_custom_call.1} parent=5 // pred_check
      %p2613 = pneg %p2612
    $region46: #{tpu_custom_call.1} parent=5 // pred_check_branch
      %2615 = sbr.rel (%p2613) target = $region48
    $region47: #{tpu_custom_call.1} parent=5 // pred_region
      %s2616 = ssub.s32 %s11, 2
      // Predicated region
      $region49: #{tpu_custom_call.1} parent=47 // pred_check
        %p2617 = pneg %p150
      $region50: #{tpu_custom_call.1} parent=47 // pred_check_branch
        %2619 = sbr.rel (%p2617) target = $region52
      $region51: #{tpu_custom_call.1} parent=47 // pred_region
        %s2620 = smul.u32 32, %s17
        %p2621 = scmp.lt.s32.totalorder %s2620, 63
        %s2622 = scalar_select %p2621, %s2620, 63
        %s2623 = smul.addr %s2622, 4
        %s2624 = scalar_lea.vmem %s5, %s2623
      $region52: #{tpu_custom_call.1} parent=47 // pred_fallthru
        _
    $region48: #{tpu_custom_call.1} parent=5 // pred_fallthru
      _
  $region6: #{tpu_custom_call.1} parent=0 // loop_footer
    %s15 = sadd.s32 1, %s11
  $region7: #{tpu_custom_call.1} parent=0 // loop_footer_branch
    %10 = sbr.rel target = $region3
  $region8: #{tpu_custom_call.1} parent=0 // loop_exit
    _

</llo_original>
